<compile_context>
chip_gen: v6e
topology: v6e:2x2x1
jax: 0.10.0
libtpu: 0.0.40
codegen_flags: <defaults>
</compile_context>

<pallas_src>
import jax
import jax.numpy as jnp
from jax import lax
from jax.experimental import pallas as pl
from jax.experimental.pallas import tpu as pltpu


# ----------------------------------------------------------------------------
# Fused kernel: relu(relu(x @ w1 + b1) @ w2 + b2)
# ----------------------------------------------------------------------------
def _dense_encoder_kernel(x_ref, w1_ref, b1_ref, w2_ref, b2_ref, z_ref):
    # x_ref : (TM, n_in)    w1_ref: (n_in, h1)   b1_ref: (1, h1)
    # w2_ref: (h1,  h2)     b2_ref: (1, h2)      z_ref : (TM, h2)
    h = jnp.dot(
        x_ref[...], w1_ref[...],
        preferred_element_type=jnp.float32, precision=lax.Precision.HIGHEST,
    )
    h = jnp.maximum(h + b1_ref[...], 0.0)                       # dense1 + ReLU
    z = jnp.dot(
        h, w2_ref[...],
        preferred_element_type=jnp.float32, precision=lax.Precision.HIGHEST,
    )
    z_ref[...] = jnp.maximum(z + b2_ref[...], 0.0).astype(z_ref.dtype)  # dense2 + ReLU


# ----------------------------------------------------------------------------
# Wrapper
# ----------------------------------------------------------------------------
def dense_encoder_forward(x, params, *, flatten_input=True, block_m=512):
    """x: (B, H, W) if flatten_input else (B, n_in)  ->  z: (B, n_hidden2)."""
    if flatten_input and x.ndim == 3:
        x = x.reshape(x.shape[0], -1)          # Rearrange('b h w -> b (h w)')
    B, n_in = x.shape

    # PyTorch Linear stores (out, in); pre-transpose once so the kernel does
    # lane-dense (M,K)@(K,N) matmuls with features on the lane axis.
    w1 = params["w1"].T                        # (n_in, h1)
    w2 = params["w2"].T                        # (h1,  h2)
    b1 = params["b1"].reshape(1, -1)           # (1, h1)
    b2 = params["b2"].reshape(1, -1)           # (1, h2)
    h1 = w1.shape[1]
    h2 = w2.shape[1]

    # Batch tile: sublane-aligned, single grid step for small batches, tiled
    # (and megacore-parallel) for large ones.
    tm = min(block_m, max(8, ((B + 7) // 8) * 8))
    M = ((B + tm - 1) // tm) * tm
    if M != B:
        x = jnp.pad(x, ((0, M - B), (0, 0)))

    flops = 2 * M * (n_in * h1 + h1 * h2)
    bytes_accessed = 4 * (M * n_in + n_in * h1 + h1 * h2 + h1 + h2 + M * h2)

    out = pl.pallas_call(
        _dense_encoder_kernel,
        out_shape=jax.ShapeDtypeStruct((M, h2), x.dtype),
        grid_spec=pl.GridSpec(
            grid=(M // tm,),
            in_specs=[
                pl.BlockSpec((tm, n_in), lambda i: (i, 0)),   # x (tiled over batch)
                pl.BlockSpec((n_in, h1), lambda i: (0, 0)),   # w1 (resident)
                pl.BlockSpec((1, h1), lambda i: (0, 0)),      # b1
                pl.BlockSpec((h1, h2), lambda i: (0, 0)),     # w2 (resident)
                pl.BlockSpec((1, h2), lambda i: (0, 0)),      # b2
            ],
            out_specs=pl.BlockSpec((tm, h2), lambda i: (i, 0)),
        ),
        compiler_params=pltpu.CompilerParams(
            dimension_semantics=("parallel",),
        ),
        cost_estimate=pl.CostEstimate(
            flops=flops, transcendentals=0, bytes_accessed=bytes_accessed
        ),
    )(x, w1, b1, w2, b2)

    return out[:B]


# ----------------------------------------------------------------------------
# Parameter init matching the PyTorch module
#   weights: kaiming_normal_(nonlinearity='relu') -> N(0, 2/fan_in)
#   biases : nn.Linear default -> U(-1/sqrt(fan_in), 1/sqrt(fan_in))
# ----------------------------------------------------------------------------
def init_params(key, n_in, n_hidden1, n_hidden2, dtype=jnp.float32):
    k1, k2, k3, k4 = jax.random.split(key, 4)
    w1 = jax.random.normal(k1, (n_hidden1, n_in), dtype) * (2.0 / n_in) ** 0.5
    w2 = jax.random.normal(k2, (n_hidden2, n_hidden1), dtype) * (2.0 / n_hidden1) ** 0.5
    b1 = jax.random.uniform(k3, (n_hidden1,), dtype, -1.0 / n_in ** 0.5, 1.0 / n_in ** 0.5)
    b2 = jax.random.uniform(
        k4, (n_hidden2,), dtype, -1.0 / n_hidden1 ** 0.5, 1.0 / n_hidden1 ** 0.5
    )
    return {"w1": w1, "b1": b1, "w2": w2, "b2": b2}


# ----------------------------------------------------------------------------
# Pure-JAX reference (same math, no Pallas) for correctness checking
# ----------------------------------------------------------------------------
def _reference_forward(x, params, *, flatten_input=True):
    if flatten_input and x.ndim == 3:
        x = x.reshape(x.shape[0], -1)
    h = jnp.maximum(
        jnp.dot(x, params["w1"].T, precision=lax.Precision.HIGHEST) + params["b1"], 0.0
    )
    z = jnp.maximum(
        jnp.dot(h, params["w2"].T, precision=lax.Precision.HIGHEST) + params["b2"], 0.0
    )
    return z


# TODO(synk): post_bn=True (BatchNorm1d after each ReLU) is not implemented;
# the module default post_bn=False (Identity) is what this kernel covers.

if __name__ == "__main__":
    key = jax.random.PRNGKey(0)
    k_x, k_p = jax.random.split(key)

    # Small shapes implied by the module with flatten_input=True:
    # x: (B, H, W) = (2, 16, 16)  ->  n_in = 256, n_hidden1 = 128, n_hidden2 = 32
    B, H, W = 2, 16, 16
    n_in, n_hidden1, n_hidden2 = H * W, 128, 32

    x = jax.random.normal(k_x, (B, H, W), jnp.float32)
    params = init_params(k_p, n_in, n_hidden1, n_hidden2)

    z = dense_encoder_forward(x, params, flatten_input=True)
    z = jax.block_until_ready(z)
    assert z.shape == (B, n_hidden2), z.shape

    z_ref = jax.block_until_ready(_reference_forward(x, params, flatten_input=True))
    assert jnp.allclose(z, z_ref, atol=1e-5, rtol=1e-5), float(jnp.max(jnp.abs(z - z_ref)))

    print("KERNEL_OK")
</pallas_src>

<mosaic_0001>
module attributes {stable_mosaic.version = 11 : i64} {
  func.func @_dense_encoder_kernel(%arg0: i32, %arg1: memref<8x256xf32, #tpu.memory_space<vmem>>, %arg2: memref<256x128xf32, #tpu.memory_space<vmem>>, %arg3: memref<1x128xf32, #tpu.memory_space<vmem>>, %arg4: memref<128x32xf32, #tpu.memory_space<vmem>>, %arg5: memref<1x32xf32, #tpu.memory_space<vmem>>, %arg6: memref<8x32xf32, #tpu.memory_space<vmem>>) attributes {dimension_semantics = [#tpu.dimension_semantics<parallel>], iteration_bounds = array<i64: 1>, scalar_prefetch = 0 : i64, scratch_operands = 0 : i64, tpu.core_type = #tpu.core_type<tc>, window_params = [{transform_indices = @transform_0, window_bounds = array<i64: 8, 256>}, {pipeline_mode = #tpu.pipeline_mode<synchronous>, transform_indices = @transform_1, window_bounds = array<i64: 256, 128>}, {pipeline_mode = #tpu.pipeline_mode<synchronous>, transform_indices = @transform_2, window_bounds = array<i64: 1, 128>}, {pipeline_mode = #tpu.pipeline_mode<synchronous>, transform_indices = @transform_3, window_bounds = array<i64: 128, 32>}, {pipeline_mode = #tpu.pipeline_mode<synchronous>, transform_indices = @transform_4, window_bounds = array<i64: 1, 32>}, {transform_indices = @transform_5, window_bounds = array<i64: 8, 32>}]} {
    %c0 = arith.constant 0 : index
    %c0_0 = arith.constant 0 : index
    %0 = vector.load %arg1[%c0, %c0_0] : memref<8x256xf32, #tpu.memory_space<vmem>>, vector<8x256xf32>
    %c0_1 = arith.constant 0 : index
    %c0_2 = arith.constant 0 : index
    %1 = vector.load %arg2[%c0_1, %c0_2] : memref<256x128xf32, #tpu.memory_space<vmem>>, vector<256x128xf32>
    %cst = arith.constant dense<0.000000e+00> : vector<8x128xf32>
    %2 = tpu.matmul %0, %1, %cst {dimension_numbers = #tpu.dot_dimension_numbers<[1], [0], [0], [1], [0, 0, 1, 1], [], []>, precision = #tpu.contract_precision<fp32>} : vector<8x256xf32>, vector<256x128xf32>, vector<8x128xf32> -> vector<8x128xf32>
    %c0_3 = arith.constant 0 : index
    %c0_4 = arith.constant 0 : index
    %3 = vector.load %arg3[%c0_3, %c0_4] : memref<1x128xf32, #tpu.memory_space<vmem>>, vector<1x128xf32>
    %4 = vector.broadcast %3 : vector<1x128xf32> to vector<8x128xf32>
    %5 = arith.addf %2, %4 : vector<8x128xf32>
    %cst_5 = arith.constant 0.000000e+00 : f32
    %6 = vector.broadcast %cst_5 : f32 to vector<8x128xf32>
    %7 = arith.maximumf %5, %6 : vector<8x128xf32>
    %c0_6 = arith.constant 0 : index
    %c0_7 = arith.constant 0 : index
    %8 = vector.load %arg4[%c0_6, %c0_7] : memref<128x32xf32, #tpu.memory_space<vmem>>, vector<128x32xf32>
    %cst_8 = arith.constant dense<0.000000e+00> : vector<8x32xf32>
    %9 = tpu.matmul %7, %8, %cst_8 {dimension_numbers = #tpu.dot_dimension_numbers<[1], [0], [0], [1], [0, 0, 1, 1], [], []>, precision = #tpu.contract_precision<fp32>} : vector<8x128xf32>, vector<128x32xf32>, vector<8x32xf32> -> vector<8x32xf32>
    %c0_9 = arith.constant 0 : index
    %c0_10 = arith.constant 0 : index
    %10 = vector.load %arg5[%c0_9, %c0_10] : memref<1x32xf32, #tpu.memory_space<vmem>>, vector<1x32xf32>
    %11 = vector.broadcast %10 : vector<1x32xf32> to vector<8x32xf32>
    %12 = arith.addf %9, %11 : vector<8x32xf32>
    %cst_11 = arith.constant 0.000000e+00 : f32
    %13 = vector.broadcast %cst_11 : f32 to vector<8x32xf32>
    %14 = arith.maximumf %12, %13 : vector<8x32xf32>
    %c0_12 = arith.constant 0 : index
    %c0_13 = arith.constant 0 : index
    %15 = vector.load %arg6[%c0_12, %c0_13] : memref<8x32xf32, #tpu.memory_space<vmem>>, vector<8x32xf32>
    tpu.vector_store %arg6[%c0_12, %c0_13], %14 {strides = array<i32>} : memref<8x32xf32, #tpu.memory_space<vmem>>, vector<8x32xf32>,
    return
  }
  func.func @transform_0(%arg0: i32) -> (i32, i32) {
    %c0_i32 = arith.constant 0 : i32
    %c0_i32_0 = arith.constant 0 : i32
    return %arg0, %c0_i32 : i32, i32
  }
  func.func @transform_1(%arg0: i32) -> (i32, i32) {
    %c0_i32 = arith.constant 0 : i32
    %c0_i32_0 = arith.constant 0 : i32
    %c0_i32_1 = arith.constant 0 : i32
    return %c0_i32, %c0_i32_0 : i32, i32
  }
  func.func @transform_2(%arg0: i32) -> (i32, i32) {
    %c0_i32 = arith.constant 0 : i32
    %c0_i32_0 = arith.constant 0 : i32
    %c0_i32_1 = arith.constant 0 : i32
    return %c0_i32, %c0_i32_0 : i32, i32
  }
  func.func @transform_3(%arg0: i32) -> (i32, i32) {
    %c0_i32 = arith.constant 0 : i32
    %c0_i32_0 = arith.constant 0 : i32
    %c0_i32_1 = arith.constant 0 : i32
    return %c0_i32, %c0_i32_0 : i32, i32
  }
  func.func @transform_4(%arg0: i32) -> (i32, i32) {
    %c0_i32 = arith.constant 0 : i32
    %c0_i32_0 = arith.constant 0 : i32
    %c0_i32_1 = arith.constant 0 : i32
    return %c0_i32, %c0_i32_0 : i32, i32
  }
  func.func @transform_5(%arg0: i32) -> (i32, i32) {
    %c0_i32 = arith.constant 0 : i32
    %c0_i32_0 = arith.constant 0 : i32
    return %arg0, %c0_i32 : i32, i32
  }
}

</mosaic_0001>

<llo_original>
// kernel: tpu_custom_call.1
$region0: #{tpu_custom_call.1}
  #allocation0 [shape = 'u32[]', space=smem, size = 0x4, offset = 0x4, fixed_abs, tag = 'smem constant byte address 0x4 - core index']
  #allocation1 [shape = 'u32[144,128]{1,0:T(1,128)}', space=vmem, size = 0x12000, scoped, tag = 'internal scratch']
  %s0 = inlined_call_operand.vmem [shape: f32[8,256], index: 0, kind: input, shape index: {}]
  %s1 = inlined_call_operand.hbm [shape: f32[256,128], index: 1, kind: input, shape index: {}]
  %s2 = inlined_call_operand.vmem [shape: f32[1,128], index: 2, kind: input, shape index: {}]
  %s3 = inlined_call_operand.vmem [shape: f32[128,32], index: 3, kind: input, shape index: {}]
  %s4 = inlined_call_operand.vmem [shape: f32[1,32], index: 4, kind: input, shape index: {}]
  %s5 = inlined_call_operand.hbm [shape: f32[8,32], index: 5, kind: output, shape index: {}]
  %s6 = sld [smem:[#allocation0]]
  $region34: #{tpu_custom_call.1} parent=0
    _
  %s8 = ssub.s32 1, %s6
  %s9 = scalar_select 0, %s8, %s6
  $region1: #{tpu_custom_call.1} parent=0
    #allocation2 [shape = 'u8[131072]{0}', space=vmem, size = 0x20000, scoped, tag = 'input window, operand 1, single buffered']
    #allocation3 [shape = 's32[1]{0}', space=sflag, size = 0x4, scoped, tag = 'scoped memory for tpu_custom_call.1']
    #allocation4 [shape = 's32[1]{0}', space=sflag, size = 0x4, scoped, tag = 'scoped memory for tpu_custom_call.1']
    #allocation5 [shape = 'u8[4096]{0}', space=vmem, size = 0x1000, scoped, tag = 'output window, operand 0, single buffered']
    %10 = vsyncpa [#allocation3], 0
    %11 = vsyncpa [#allocation4], 0
    // Predicated region
    $region2: #{tpu_custom_call.1} parent=1 // pred_check
      _
    $region3: #{tpu_custom_call.1} parent=1 // pred_check_branch
      %13 = sbr.rel (0) target = $region5
    $region4: #{tpu_custom_call.1} parent=1 // pred_region
      _
    $region5: #{tpu_custom_call.1} parent=1 // pred_fallthru
      _
    // Predicated region
    $region6: #{tpu_custom_call.1} parent=1 // pred_check
      _
    $region7: #{tpu_custom_call.1} parent=1 // pred_check_branch
      %15 = sbr.rel (0) target = $region9
    $region8: #{tpu_custom_call.1} parent=1 // pred_region
      %s17 = ssub.s32 4096, 4096
      %18 = vsyncadd [#allocation3], %s17
      %s19 = sshll.u32 [#allocation2], 4
      %s20 = int_to_ptr.vmem [resolvable:$true] %s19
      %25 = dma.hbm_to_vmem [thread:$0]  %s1, 4096, %s20, [#allocation3], 128, 128, 8
    $region9: #{tpu_custom_call.1} parent=1 // pred_fallthru
      _
    // Predicated region
    $region10: #{tpu_custom_call.1} parent=1 // pred_check
      _
    $region11: #{tpu_custom_call.1} parent=1 // pred_check_branch
      %27 = sbr.rel (0) target = $region13
    $region12: #{tpu_custom_call.1} parent=1 // pred_region
      _
    $region13: #{tpu_custom_call.1} parent=1 // pred_fallthru
      _
    // Predicated region
    $region14: #{tpu_custom_call.1} parent=1 // pred_check
      _
    $region15: #{tpu_custom_call.1} parent=1 // pred_check_branch
      %29 = sbr.rel (0) target = $region17
    $region16: #{tpu_custom_call.1} parent=1 // pred_region
      _
    $region17: #{tpu_custom_call.1} parent=1 // pred_fallthru
      _
    // Predicated region
    $region18: #{tpu_custom_call.1} parent=1 // pred_check
      _
    $region19: #{tpu_custom_call.1} parent=1 // pred_check_branch
      %31 = sbr.rel (0) target = $region21
    $region20: #{tpu_custom_call.1} parent=1 // pred_region
      _
    $region21: #{tpu_custom_call.1} parent=1 // pred_fallthru
      _
    // Predicated region
    $region22: #{tpu_custom_call.1} parent=1 // pred_check
      _
    $region23: #{tpu_custom_call.1} parent=1 // pred_check_branch
      %33 = sbr.rel (0) target = $region25
    $region24: #{tpu_custom_call.1} parent=1 // pred_region
      %34 = dma.done [#allocation3], 4096
    $region25: #{tpu_custom_call.1} parent=1 // pred_fallthru
      _
    %v35 = vld [vmem:[%s0] sm:$0xff]
    %v36 = vld [vmem:[%s0 + $0x8] sm:$0xff]
    %v37 = vld [vmem:[#allocation2] sm:$0xff]
    %v38 = vld [vmem:[#allocation2 + $0x8] sm:$0xff]
    %v39 = vld [vmem:[#allocation2 + $0x10] sm:$0xff]
    %v40 = vld [vmem:[#allocation2 + $0x18] sm:$0xff]
    %v41 = vld [vmem:[#allocation2 + $0x20] sm:$0xff]
    %v42 = vld [vmem:[#allocation2 + $0x28] sm:$0xff]
    %v43 = vld [vmem:[#allocation2 + $0x30] sm:$0xff]
    %v44 = vld [vmem:[#allocation2 + $0x38] sm:$0xff]
    %v45 = vld [vmem:[#allocation2 + $0x40] sm:$0xff]
    %v46 = vld [vmem:[#allocation2 + $0x48] sm:$0xff]
    %v47 = vld [vmem:[#allocation2 + $0x50] sm:$0xff]
    %v48 = vld [vmem:[#allocation2 + $0x58] sm:$0xff]
    %v49 = vld [vmem:[#allocation2 + $0x60] sm:$0xff]
    %v50 = vld [vmem:[#allocation2 + $0x68] sm:$0xff]
    %v51 = vld [vmem:[#allocation2 + $0x70] sm:$0xff]
    %v52 = vld [vmem:[#allocation2 + $0x78] sm:$0xff]
    %v53 = vld [vmem:[#allocation2 + $0x80] sm:$0xff]
    %v54 = vld [vmem:[#allocation2 + $0x88] sm:$0xff]
    %v55 = vld [vmem:[#allocation2 + $0x90] sm:$0xff]
    %v56 = vld [vmem:[#allocation2 + $0x98] sm:$0xff]
    %v57 = vld [vmem:[#allocation2 + $0xa0] sm:$0xff]
    %v58 = vld [vmem:[#allocation2 + $0xa8] sm:$0xff]
    %v59 = vld [vmem:[#allocation2 + $0xb0] sm:$0xff]
    %v60 = vld [vmem:[#allocation2 + $0xb8] sm:$0xff]
    %v61 = vld [vmem:[#allocation2 + $0xc0] sm:$0xff]
    %v62 = vld [vmem:[#allocation2 + $0xc8] sm:$0xff]
    %v63 = vld [vmem:[#allocation2 + $0xd0] sm:$0xff]
    %v64 = vld [vmem:[#allocation2 + $0xd8] sm:$0xff]
    %v65 = vld [vmem:[#allocation2 + $0xe0] sm:$0xff]
    %v66 = vld [vmem:[#allocation2 + $0xe8] sm:$0xff]
    %v67 = vld [vmem:[#allocation2 + $0xf0] sm:$0xff]
    %v68 = vld [vmem:[#allocation2 + $0xf8] sm:$0xff]
    %v69 = vld [vmem:[%s2] sm:$0x1]
    %v71 = vlaneseq
    %v72 = vshrl.u32 %v71, 7
    %v73 = vsub.s32 0, %v72
    %v74 = vrot.slane %v69, %v73
    %76 = vmatprep.subr.mxu0 0.0
    %v77 = vand.u32 %v52, 4294901760
    %78 = vmatpush1.msra.mxu0 %v77
    %79 = vmatprep.subr.mxu0 0.0
    %v80 = vand.u32 %v51, 4294901760
    %81 = vmatpush1.msra.mxu0 %v80
    %82 = vmatprep.subr.mxu0 0.0
    %v83 = vand.u32 %v50, 4294901760
    %84 = vmatpush1.msra.mxu0 %v83
    %85 = vmatprep.subr.mxu0 0.0
    %v86 = vand.u32 %v49, 4294901760
    %87 = vmatpush1.msra.mxu0 %v86
    %88 = vmatprep.subr.mxu0 0.0
    %v89 = vand.u32 %v48, 4294901760
    %90 = vmatpush1.msra.mxu0 %v89
    %91 = vmatprep.subr.mxu0 0.0
    %v92 = vand.u32 %v47, 4294901760
    %93 = vmatpush1.msra.mxu0 %v92
    %94 = vmatprep.subr.mxu0 0.0
    %v95 = vand.u32 %v46, 4294901760
    %96 = vmatpush1.msra.mxu0 %v95
    %97 = vmatprep.subr.mxu0 0.0
    %v98 = vand.u32 %v45, 4294901760
    %99 = vmatpush1.msra.mxu0 %v98
    %100 = vmatprep.subr.mxu0 0.0
    %v101 = vand.u32 %v44, 4294901760
    %102 = vmatpush1.msra.mxu0 %v101
    %103 = vmatprep.subr.mxu0 0.0
    %v104 = vand.u32 %v43, 4294901760
    %105 = vmatpush1.msra.mxu0 %v104
    %106 = vmatprep.subr.mxu0 0.0
    %v107 = vand.u32 %v42, 4294901760
    %108 = vmatpush1.msra.mxu0 %v107
    %109 = vmatprep.subr.mxu0 0.0
    %v110 = vand.u32 %v41, 4294901760
    %111 = vmatpush1.msra.mxu0 %v110
    %112 = vmatprep.subr.mxu0 0.0
    %v113 = vand.u32 %v40, 4294901760
    %114 = vmatpush1.msra.mxu0 %v113
    %115 = vmatprep.subr.mxu0 0.0
    %v116 = vand.u32 %v39, 4294901760
    %117 = vmatpush1.msra.mxu0 %v116
    %118 = vmatprep.subr.mxu0 0.0
    %v119 = vand.u32 %v38, 4294901760
    %120 = vmatpush1.msra.mxu0 %v119
    %121 = vmatprep.subr.mxu0 0.0
    %v122 = vand.u32 %v37, 4294901760
    %123 = vmatpush1.msra.mxu0 %v122
    %124 = vmatprep.subr.mxu0 0.0
    %v125 = vand.u32 %v68, 4294901760
    %126 = vmatpush2.msra.mxu0 %v125
    %127 = vmatprep.subr.mxu0 0.0
    %v128 = vand.u32 %v67, 4294901760
    %129 = vmatpush2.msra.mxu0 %v128
    %130 = vmatprep.subr.mxu0 0.0
    %v131 = vand.u32 %v66, 4294901760
    %132 = vmatpush2.msra.mxu0 %v131
    %133 = vmatprep.subr.mxu0 0.0
    %v134 = vand.u32 %v65, 4294901760
    %135 = vmatpush2.msra.mxu0 %v134
    %136 = vmatprep.subr.mxu0 0.0
    %v137 = vand.u32 %v64, 4294901760
    %138 = vmatpush2.msra.mxu0 %v137
    %139 = vmatprep.subr.mxu0 0.0
    %v140 = vand.u32 %v63, 4294901760
    %141 = vmatpush2.msra.mxu0 %v140
    %142 = vmatprep.subr.mxu0 0.0
    %v143 = vand.u32 %v62, 4294901760
    %144 = vmatpush2.msra.mxu0 %v143
    %145 = vmatprep.subr.mxu0 0.0
    %v146 = vand.u32 %v61, 4294901760
    %147 = vmatpush2.msra.mxu0 %v146
    %148 = vmatprep.subr.mxu0 0.0
    %v149 = vand.u32 %v60, 4294901760
    %150 = vmatpush2.msra.mxu0 %v149
    %151 = vmatprep.subr.mxu0 0.0
    %v152 = vand.u32 %v59, 4294901760
    %153 = vmatpush2.msra.mxu0 %v152
    %154 = vmatprep.subr.mxu0 0.0
    %v155 = vand.u32 %v58, 4294901760
    %156 = vmatpush2.msra.mxu0 %v155
    %157 = vmatprep.subr.mxu0 0.0
    %v158 = vand.u32 %v57, 4294901760
    %159 = vmatpush2.msra.mxu0 %v158
    %160 = vmatprep.subr.mxu0 0.0
    %v161 = vand.u32 %v56, 4294901760
    %162 = vmatpush2.msra.mxu0 %v161
    %163 = vmatprep.subr.mxu0 0.0
    %v164 = vand.u32 %v55, 4294901760
    %165 = vmatpush2.msra.mxu0 %v164
    %166 = vmatprep.subr.mxu0 0.0
    %v167 = vand.u32 %v54, 4294901760
    %168 = vmatpush2.msra.mxu0 %v167
    %169 = vmatprep.subr.mxu0 0.0
    %v170 = vand.u32 %v53, 4294901760
    %171 = vmatpush2.msra.mxu0 %v170
    %v172 = vand.u32 %v36, 4294901760
    %v173 = vsub.f32 %v36, %v172
    %v174 = vand.u32 %v173, 4294901760
    %v175 = vsub.f32 %v173, %v174
    %v176 = vand.u32 %v175, 4294901760
    %177 = vmatprep.mubr.f32.mxu0 %v176
    %v178 = vand.u32 %v35, 4294901760
    %v179 = vsub.f32 %v35, %v178
    %v180 = vand.u32 %v179, 4294901760
    %v181 = vsub.f32 %v179, %v180
    %v182 = vand.u32 %v181, 4294901760
    %183 = vmatmul.mubr.f32.gmra.mxu0 %v182
    %v184 = vpop.f32.mrf.mxu0
    %v185 = vadd.f32 %v74, %v184
    %v186 = vpop.f32.mrf.mxu0
    %187 = vdwg.mxu0
    %188 = vmatprep.subr.mxu0 0.0
    %v189 = vand.u32 %v52, 4294901760
    %v190 = vsub.f32 %v52, %v189
    %v191 = vand.u32 %v190, 4294901760
    %v192 = vsub.f32 %v190, %v191
    %v193 = vand.u32 %v192, 4294901760
    %194 = vmatpush1.msra.mxu0 %v193
    %195 = vmatprep.subr.mxu0 0.0
    %v196 = vand.u32 %v51, 4294901760
    %v197 = vsub.f32 %v51, %v196
    %v198 = vand.u32 %v197, 4294901760
    %v199 = vsub.f32 %v197, %v198
    %v200 = vand.u32 %v199, 4294901760
    %201 = vmatpush1.msra.mxu0 %v200
    %202 = vmatprep.subr.mxu0 0.0
    %v203 = vand.u32 %v50, 4294901760
    %v204 = vsub.f32 %v50, %v203
    %v205 = vand.u32 %v204, 4294901760
    %v206 = vsub.f32 %v204, %v205
    %v207 = vand.u32 %v206, 4294901760
    %208 = vmatpush1.msra.mxu0 %v207
    %209 = vmatprep.subr.mxu0 0.0
    %v210 = vand.u32 %v49, 4294901760
    %v211 = vsub.f32 %v49, %v210
    %v212 = vand.u32 %v211, 4294901760
    %v213 = vsub.f32 %v211, %v212
    %v214 = vand.u32 %v213, 4294901760
    %215 = vmatpush1.msra.mxu0 %v214
    %216 = vmatprep.subr.mxu0 0.0
    %v217 = vand.u32 %v48, 4294901760
    %v218 = vsub.f32 %v48, %v217
    %v219 = vand.u32 %v218, 4294901760
    %v220 = vsub.f32 %v218, %v219
    %v221 = vand.u32 %v220, 4294901760
    %222 = vmatpush1.msra.mxu0 %v221
    %223 = vmatprep.subr.mxu0 0.0
    %v224 = vand.u32 %v47, 4294901760
    %v225 = vsub.f32 %v47, %v224
    %v226 = vand.u32 %v225, 4294901760
    %v227 = vsub.f32 %v225, %v226
    %v228 = vand.u32 %v227, 4294901760
    %229 = vmatpush1.msra.mxu0 %v228
    %230 = vmatprep.subr.mxu0 0.0
    %v231 = vand.u32 %v46, 4294901760
    %v232 = vsub.f32 %v46, %v231
    %v233 = vand.u32 %v232, 4294901760
    %v234 = vsub.f32 %v232, %v233
    %v235 = vand.u32 %v234, 4294901760
    %236 = vmatpush1.msra.mxu0 %v235
    %237 = vmatprep.subr.mxu0 0.0
    %v238 = vand.u32 %v45, 4294901760
    %v239 = vsub.f32 %v45, %v238
    %v240 = vand.u32 %v239, 4294901760
    %v241 = vsub.f32 %v239, %v240
    %v242 = vand.u32 %v241, 4294901760
    %243 = vmatpush1.msra.mxu0 %v242
    %244 = vmatprep.subr.mxu0 0.0
    %v245 = vand.u32 %v44, 4294901760
    %v246 = vsub.f32 %v44, %v245
    %v247 = vand.u32 %v246, 4294901760
    %v248 = vsub.f32 %v246, %v247
    %v249 = vand.u32 %v248, 4294901760
    %250 = vmatpush1.msra.mxu0 %v249
    %251 = vmatprep.subr.mxu0 0.0
    %v252 = vand.u32 %v43, 4294901760
    %v253 = vsub.f32 %v43, %v252
    %v254 = vand.u32 %v253, 4294901760
    %v255 = vsub.f32 %v253, %v254
    %v256 = vand.u32 %v255, 4294901760
    %257 = vmatpush1.msra.mxu0 %v256
    %258 = vmatprep.subr.mxu0 0.0
    %v259 = vand.u32 %v42, 4294901760
    %v260 = vsub.f32 %v42, %v259
    %v261 = vand.u32 %v260, 4294901760
    %v262 = vsub.f32 %v260, %v261
    %v263 = vand.u32 %v262, 4294901760
    %264 = vmatpush1.msra.mxu0 %v263
    %265 = vmatprep.subr.mxu0 0.0
    %v266 = vand.u32 %v41, 4294901760
    %v267 = vsub.f32 %v41, %v266
    %v268 = vand.u32 %v267, 4294901760
    %v269 = vsub.f32 %v267, %v268
    %v270 = vand.u32 %v269, 4294901760
    %271 = vmatpush1.msra.mxu0 %v270
    %272 = vmatprep.subr.mxu0 0.0
    %v273 = vand.u32 %v40, 4294901760
    %v274 = vsub.f32 %v40, %v273
    %v275 = vand.u32 %v274, 4294901760
    %v276 = vsub.f32 %v274, %v275
    %v277 = vand.u32 %v276, 4294901760
    %278 = vmatpush1.msra.mxu0 %v277
    %279 = vmatprep.subr.mxu0 0.0
    %v280 = vand.u32 %v39, 4294901760
    %v281 = vsub.f32 %v39, %v280
    %v282 = vand.u32 %v281, 4294901760
    %v283 = vsub.f32 %v281, %v282
    %v284 = vand.u32 %v283, 4294901760
    %285 = vmatpush1.msra.mxu0 %v284
    %286 = vmatprep.subr.mxu0 0.0
    %v287 = vand.u32 %v38, 4294901760
    %v288 = vsub.f32 %v38, %v287
    %v289 = vand.u32 %v288, 4294901760
    %v290 = vsub.f32 %v288, %v289
    %v291 = vand.u32 %v290, 4294901760
    %292 = vmatpush1.msra.mxu0 %v291
    %293 = vmatprep.subr.mxu0 0.0
    %v294 = vand.u32 %v37, 4294901760
    %v295 = vsub.f32 %v37, %v294
    %v296 = vand.u32 %v295, 4294901760
    %v297 = vsub.f32 %v295, %v296
    %v298 = vand.u32 %v297, 4294901760
    %299 = vmatpush1.msra.mxu0 %v298
    %300 = vmatprep.subr.mxu0 0.0
    %v301 = vand.u32 %v68, 4294901760
    %v302 = vsub.f32 %v68, %v301
    %v303 = vand.u32 %v302, 4294901760
    %v304 = vsub.f32 %v302, %v303
    %v305 = vand.u32 %v304, 4294901760
    %306 = vmatpush2.msra.mxu0 %v305
    %307 = vmatprep.subr.mxu0 0.0
    %v308 = vand.u32 %v67, 4294901760
    %v309 = vsub.f32 %v67, %v308
    %v310 = vand.u32 %v309, 4294901760
    %v311 = vsub.f32 %v309, %v310
    %v312 = vand.u32 %v311, 4294901760
    %313 = vmatpush2.msra.mxu0 %v312
    %314 = vmatprep.subr.mxu0 0.0
    %v315 = vand.u32 %v66, 4294901760
    %v316 = vsub.f32 %v66, %v315
    %v317 = vand.u32 %v316, 4294901760
    %v318 = vsub.f32 %v316, %v317
    %v319 = vand.u32 %v318, 4294901760
    %320 = vmatpush2.msra.mxu0 %v319
    %321 = vmatprep.subr.mxu0 0.0
    %v322 = vand.u32 %v65, 4294901760
    %v323 = vsub.f32 %v65, %v322
    %v324 = vand.u32 %v323, 4294901760
    %v325 = vsub.f32 %v323, %v324
    %v326 = vand.u32 %v325, 4294901760
    %327 = vmatpush2.msra.mxu0 %v326
    %328 = vmatprep.subr.mxu0 0.0
    %v329 = vand.u32 %v64, 4294901760
    %v330 = vsub.f32 %v64, %v329
    %v331 = vand.u32 %v330, 4294901760
    %v332 = vsub.f32 %v330, %v331
    %v333 = vand.u32 %v332, 4294901760
    %334 = vmatpush2.msra.mxu0 %v333
    %335 = vmatprep.subr.mxu0 0.0
    %v336 = vand.u32 %v63, 4294901760
    %v337 = vsub.f32 %v63, %v336
    %v338 = vand.u32 %v337, 4294901760
    %v339 = vsub.f32 %v337, %v338
    %v340 = vand.u32 %v339, 4294901760
    %341 = vmatpush2.msra.mxu0 %v340
    %342 = vmatprep.subr.mxu0 0.0
    %v343 = vand.u32 %v62, 4294901760
    %v344 = vsub.f32 %v62, %v343
    %v345 = vand.u32 %v344, 4294901760
    %v346 = vsub.f32 %v344, %v345
    %v347 = vand.u32 %v346, 4294901760
    %348 = vmatpush2.msra.mxu0 %v347
    %349 = vmatprep.subr.mxu0 0.0
    %v350 = vand.u32 %v61, 4294901760
    %v351 = vsub.f32 %v61, %v350
    %v352 = vand.u32 %v351, 4294901760
    %v353 = vsub.f32 %v351, %v352
    %v354 = vand.u32 %v353, 4294901760
    %355 = vmatpush2.msra.mxu0 %v354
    %356 = vmatprep.subr.mxu0 0.0
    %v357 = vand.u32 %v60, 4294901760
    %v358 = vsub.f32 %v60, %v357
    %v359 = vand.u32 %v358, 4294901760
    %v360 = vsub.f32 %v358, %v359
    %v361 = vand.u32 %v360, 4294901760
    %362 = vmatpush2.msra.mxu0 %v361
    %363 = vmatprep.subr.mxu0 0.0
    %v364 = vand.u32 %v59, 4294901760
    %v365 = vsub.f32 %v59, %v364
    %v366 = vand.u32 %v365, 4294901760
    %v367 = vsub.f32 %v365, %v366
    %v368 = vand.u32 %v367, 4294901760
    %369 = vmatpush2.msra.mxu0 %v368
    %370 = vmatprep.subr.mxu0 0.0
    %v371 = vand.u32 %v58, 4294901760
    %v372 = vsub.f32 %v58, %v371
    %v373 = vand.u32 %v372, 4294901760
    %v374 = vsub.f32 %v372, %v373
    %v375 = vand.u32 %v374, 4294901760
    %376 = vmatpush2.msra.mxu0 %v375
    %377 = vmatprep.subr.mxu0 0.0
    %v378 = vand.u32 %v57, 4294901760
    %v379 = vsub.f32 %v57, %v378
    %v380 = vand.u32 %v379, 4294901760
    %v381 = vsub.f32 %v379, %v380
    %v382 = vand.u32 %v381, 4294901760
    %383 = vmatpush2.msra.mxu0 %v382
    %384 = vmatprep.subr.mxu0 0.0
    %v385 = vand.u32 %v56, 4294901760
    %v386 = vsub.f32 %v56, %v385
    %v387 = vand.u32 %v386, 4294901760
    %v388 = vsub.f32 %v386, %v387
    %v389 = vand.u32 %v388, 4294901760
    %390 = vmatpush2.msra.mxu0 %v389
    %391 = vmatprep.subr.mxu0 0.0
    %v392 = vand.u32 %v55, 4294901760
    %v393 = vsub.f32 %v55, %v392
    %v394 = vand.u32 %v393, 4294901760
    %v395 = vsub.f32 %v393, %v394
    %v396 = vand.u32 %v395, 4294901760
    %397 = vmatpush2.msra.mxu0 %v396
    %398 = vmatprep.subr.mxu0 0.0
    %v399 = vand.u32 %v54, 4294901760
    %v400 = vsub.f32 %v54, %v399
    %v401 = vand.u32 %v400, 4294901760
    %v402 = vsub.f32 %v400, %v401
    %v403 = vand.u32 %v402, 4294901760
    %404 = vmatpush2.msra.mxu0 %v403
    %405 = vmatprep.subr.mxu0 0.0
    %v406 = vand.u32 %v53, 4294901760
    %v407 = vsub.f32 %v53, %v406
    %v408 = vand.u32 %v407, 4294901760
    %v409 = vsub.f32 %v407, %v408
    %v410 = vand.u32 %v409, 4294901760
    %411 = vmatpush2.msra.mxu0 %v410
    %v412 = vand.u32 %v36, 4294901760
    %413 = vmatprep.mubr.f32.mxu0 %v412
    %v414 = vand.u32 %v35, 4294901760
    %415 = vmatmul.mubr.f32.gmra.mxu0 %v414
    %v416 = vpop.f32.mrf.mxu0
    %v417 = vadd.f32 %v185, %v416
    %v418 = vpop.f32.mrf.mxu0
    %419 = vdwg.mxu0
    %420 = vmatprep.subr.mxu0 0.0
    %v421 = vand.u32 %v52, 4294901760
    %v422 = vsub.f32 %v52, %v421
    %423 = vmatpush1.msra.mxu0 %v422
    %424 = vmatprep.subr.mxu0 0.0
    %v425 = vand.u32 %v51, 4294901760
    %v426 = vsub.f32 %v51, %v425
    %427 = vmatpush1.msra.mxu0 %v426
    %428 = vmatprep.subr.mxu0 0.0
    %v429 = vand.u32 %v50, 4294901760
    %v430 = vsub.f32 %v50, %v429
    %431 = vmatpush1.msra.mxu0 %v430
    %432 = vmatprep.subr.mxu0 0.0
    %v433 = vand.u32 %v49, 4294901760
    %v434 = vsub.f32 %v49, %v433
    %435 = vmatpush1.msra.mxu0 %v434
    %436 = vmatprep.subr.mxu0 0.0
    %v437 = vand.u32 %v48, 4294901760
    %v438 = vsub.f32 %v48, %v437
    %439 = vmatpush1.msra.mxu0 %v438
    %440 = vmatprep.subr.mxu0 0.0
    %v441 = vand.u32 %v47, 4294901760
    %v442 = vsub.f32 %v47, %v441
    %443 = vmatpush1.msra.mxu0 %v442
    %444 = vmatprep.subr.mxu0 0.0
    %v445 = vand.u32 %v46, 4294901760
    %v446 = vsub.f32 %v46, %v445
    %447 = vmatpush1.msra.mxu0 %v446
    %448 = vmatprep.subr.mxu0 0.0
    %v449 = vand.u32 %v45, 4294901760
    %v450 = vsub.f32 %v45, %v449
    %451 = vmatpush1.msra.mxu0 %v450
    %452 = vmatprep.subr.mxu0 0.0
    %v453 = vand.u32 %v44, 4294901760
    %v454 = vsub.f32 %v44, %v453
    %455 = vmatpush1.msra.mxu0 %v454
    %456 = vmatprep.subr.mxu0 0.0
    %v457 = vand.u32 %v43, 4294901760
    %v458 = vsub.f32 %v43, %v457
    %459 = vmatpush1.msra.mxu0 %v458
    %460 = vmatprep.subr.mxu0 0.0
    %v461 = vand.u32 %v42, 4294901760
    %v462 = vsub.f32 %v42, %v461
    %463 = vmatpush1.msra.mxu0 %v462
    %464 = vmatprep.subr.mxu0 0.0
    %v465 = vand.u32 %v41, 4294901760
    %v466 = vsub.f32 %v41, %v465
    %467 = vmatpush1.msra.mxu0 %v466
    %468 = vmatprep.subr.mxu0 0.0
    %v469 = vand.u32 %v40, 4294901760
    %v470 = vsub.f32 %v40, %v469
    %471 = vmatpush1.msra.mxu0 %v470
    %472 = vmatprep.subr.mxu0 0.0
    %v473 = vand.u32 %v39, 4294901760
    %v474 = vsub.f32 %v39, %v473
    %475 = vmatpush1.msra.mxu0 %v474
    %476 = vmatprep.subr.mxu0 0.0
    %v477 = vand.u32 %v38, 4294901760
    %v478 = vsub.f32 %v38, %v477
    %479 = vmatpush1.msra.mxu0 %v478
    %480 = vmatprep.subr.mxu0 0.0
    %v481 = vand.u32 %v37, 4294901760
    %v482 = vsub.f32 %v37, %v481
    %483 = vmatpush1.msra.mxu0 %v482
    %484 = vmatprep.subr.mxu0 0.0
    %v485 = vand.u32 %v68, 4294901760
    %v486 = vsub.f32 %v68, %v485
    %487 = vmatpush2.msra.mxu0 %v486
    %488 = vmatprep.subr.mxu0 0.0
    %v489 = vand.u32 %v67, 4294901760
    %v490 = vsub.f32 %v67, %v489
    %491 = vmatpush2.msra.mxu0 %v490
    %492 = vmatprep.subr.mxu0 0.0
    %v493 = vand.u32 %v66, 4294901760
    %v494 = vsub.f32 %v66, %v493
    %495 = vmatpush2.msra.mxu0 %v494
    %496 = vmatprep.subr.mxu0 0.0
    %v497 = vand.u32 %v65, 4294901760
    %v498 = vsub.f32 %v65, %v497
    %499 = vmatpush2.msra.mxu0 %v498
    %500 = vmatprep.subr.mxu0 0.0
    %v501 = vand.u32 %v64, 4294901760
    %v502 = vsub.f32 %v64, %v501
    %503 = vmatpush2.msra.mxu0 %v502
    %504 = vmatprep.subr.mxu0 0.0
    %v505 = vand.u32 %v63, 4294901760
    %v506 = vsub.f32 %v63, %v505
    %507 = vmatpush2.msra.mxu0 %v506
    %508 = vmatprep.subr.mxu0 0.0
    %v509 = vand.u32 %v62, 4294901760
    %v510 = vsub.f32 %v62, %v509
    %511 = vmatpush2.msra.mxu0 %v510
    %512 = vmatprep.subr.mxu0 0.0
    %v513 = vand.u32 %v61, 4294901760
    %v514 = vsub.f32 %v61, %v513
    %515 = vmatpush2.msra.mxu0 %v514
    %516 = vmatprep.subr.mxu0 0.0
    %v517 = vand.u32 %v60, 4294901760
    %v518 = vsub.f32 %v60, %v517
    %519 = vmatpush2.msra.mxu0 %v518
    %520 = vmatprep.subr.mxu0 0.0
    %v521 = vand.u32 %v59, 4294901760
    %v522 = vsub.f32 %v59, %v521
    %523 = vmatpush2.msra.mxu0 %v522
    %524 = vmatprep.subr.mxu0 0.0
    %v525 = vand.u32 %v58, 4294901760
    %v526 = vsub.f32 %v58, %v525
    %527 = vmatpush2.msra.mxu0 %v526
    %528 = vmatprep.subr.mxu0 0.0
    %v529 = vand.u32 %v57, 4294901760
    %v530 = vsub.f32 %v57, %v529
    %531 = vmatpush2.msra.mxu0 %v530
    %532 = vmatprep.subr.mxu0 0.0
    %v533 = vand.u32 %v56, 4294901760
    %v534 = vsub.f32 %v56, %v533
    %535 = vmatpush2.msra.mxu0 %v534
    %536 = vmatprep.subr.mxu0 0.0
    %v537 = vand.u32 %v55, 4294901760
    %v538 = vsub.f32 %v55, %v537
    %539 = vmatpush2.msra.mxu0 %v538
    %540 = vmatprep.subr.mxu0 0.0
    %v541 = vand.u32 %v54, 4294901760
    %v542 = vsub.f32 %v54, %v541
    %543 = vmatpush2.msra.mxu0 %v542
    %544 = vmatprep.subr.mxu0 0.0
    %v545 = vand.u32 %v53, 4294901760
    %v546 = vsub.f32 %v53, %v545
    %547 = vmatpush2.msra.mxu0 %v546
    %v548 = vand.u32 %v36, 4294901760
    %v549 = vsub.f32 %v36, %v548
    %550 = vmatprep.mubr.f32.mxu0 %v549
    %v551 = vand.u32 %v35, 4294901760
    %v552 = vsub.f32 %v35, %v551
    %553 = vmatmul.mubr.f32.gmra.mxu0 %v552
    %v554 = vpop.f32.mrf.mxu0
    %v555 = vadd.f32 %v417, %v554
    %v556 = vpop.f32.mrf.mxu0
    %557 = vdwg.mxu0
    %558 = vmatprep.subr.mxu0 0.0
    %v559 = vand.u32 %v52, 4294901760
    %560 = vmatpush1.msra.mxu0 %v559
    %561 = vmatprep.subr.mxu0 0.0
    %v562 = vand.u32 %v51, 4294901760
    %563 = vmatpush1.msra.mxu0 %v562
    %564 = vmatprep.subr.mxu0 0.0
    %v565 = vand.u32 %v50, 4294901760
    %566 = vmatpush1.msra.mxu0 %v565
    %567 = vmatprep.subr.mxu0 0.0
    %v568 = vand.u32 %v49, 4294901760
    %569 = vmatpush1.msra.mxu0 %v568
    %570 = vmatprep.subr.mxu0 0.0
    %v571 = vand.u32 %v48, 4294901760
    %572 = vmatpush1.msra.mxu0 %v571
    %573 = vmatprep.subr.mxu0 0.0
    %v574 = vand.u32 %v47, 4294901760
    %575 = vmatpush1.msra.mxu0 %v574
    %576 = vmatprep.subr.mxu0 0.0
    %v577 = vand.u32 %v46, 4294901760
    %578 = vmatpush1.msra.mxu0 %v577
    %579 = vmatprep.subr.mxu0 0.0
    %v580 = vand.u32 %v45, 4294901760
    %581 = vmatpush1.msra.mxu0 %v580
    %582 = vmatprep.subr.mxu0 0.0
    %v583 = vand.u32 %v44, 4294901760
    %584 = vmatpush1.msra.mxu0 %v583
    %585 = vmatprep.subr.mxu0 0.0
    %v586 = vand.u32 %v43, 4294901760
    %587 = vmatpush1.msra.mxu0 %v586
    %588 = vmatprep.subr.mxu0 0.0
    %v589 = vand.u32 %v42, 4294901760
    %590 = vmatpush1.msra.mxu0 %v589
    %591 = vmatprep.subr.mxu0 0.0
    %v592 = vand.u32 %v41, 4294901760
    %593 = vmatpush1.msra.mxu0 %v592
    %594 = vmatprep.subr.mxu0 0.0
    %v595 = vand.u32 %v40, 4294901760
    %596 = vmatpush1.msra.mxu0 %v595
    %597 = vmatprep.subr.mxu0 0.0
    %v598 = vand.u32 %v39, 4294901760
    %599 = vmatpush1.msra.mxu0 %v598
    %600 = vmatprep.subr.mxu0 0.0
    %v601 = vand.u32 %v38, 4294901760
    %602 = vmatpush1.msra.mxu0 %v601
    %603 = vmatprep.subr.mxu0 0.0
    %v604 = vand.u32 %v37, 4294901760
    %605 = vmatpush1.msra.mxu0 %v604
    %606 = vmatprep.subr.mxu0 0.0
    %v607 = vand.u32 %v68, 4294901760
    %608 = vmatpush2.msra.mxu0 %v607
    %609 = vmatprep.subr.mxu0 0.0
    %v610 = vand.u32 %v67, 4294901760
    %611 = vmatpush2.msra.mxu0 %v610
    %612 = vmatprep.subr.mxu0 0.0
    %v613 = vand.u32 %v66, 4294901760
    %614 = vmatpush2.msra.mxu0 %v613
    %615 = vmatprep.subr.mxu0 0.0
    %v616 = vand.u32 %v65, 4294901760
    %617 = vmatpush2.msra.mxu0 %v616
    %618 = vmatprep.subr.mxu0 0.0
    %v619 = vand.u32 %v64, 4294901760
    %620 = vmatpush2.msra.mxu0 %v619
    %621 = vmatprep.subr.mxu0 0.0
    %v622 = vand.u32 %v63, 4294901760
    %623 = vmatpush2.msra.mxu0 %v622
    %624 = vmatprep.subr.mxu0 0.0
    %v625 = vand.u32 %v62, 4294901760
    %626 = vmatpush2.msra.mxu0 %v625
    %627 = vmatprep.subr.mxu0 0.0
    %v628 = vand.u32 %v61, 4294901760
    %629 = vmatpush2.msra.mxu0 %v628
    %630 = vmatprep.subr.mxu0 0.0
    %v631 = vand.u32 %v60, 4294901760
    %632 = vmatpush2.msra.mxu0 %v631
    %633 = vmatprep.subr.mxu0 0.0
    %v634 = vand.u32 %v59, 4294901760
    %635 = vmatpush2.msra.mxu0 %v634
    %636 = vmatprep.subr.mxu0 0.0
    %v637 = vand.u32 %v58, 4294901760
    %638 = vmatpush2.msra.mxu0 %v637
    %639 = vmatprep.subr.mxu0 0.0
    %v640 = vand.u32 %v57, 4294901760
    %641 = vmatpush2.msra.mxu0 %v640
    %642 = vmatprep.subr.mxu0 0.0
    %v643 = vand.u32 %v56, 4294901760
    %644 = vmatpush2.msra.mxu0 %v643
    %645 = vmatprep.subr.mxu0 0.0
    %v646 = vand.u32 %v55, 4294901760
    %647 = vmatpush2.msra.mxu0 %v646
    %648 = vmatprep.subr.mxu0 0.0
    %v649 = vand.u32 %v54, 4294901760
    %650 = vmatpush2.msra.mxu0 %v649
    %651 = vmatprep.subr.mxu0 0.0
    %v652 = vand.u32 %v53, 4294901760
    %653 = vmatpush2.msra.mxu0 %v652
    %v654 = vand.u32 %v36, 4294901760
    %v655 = vsub.f32 %v36, %v654
    %v656 = vand.u32 %v655, 4294901760
    %657 = vmatprep.mubr.f32.mxu0 %v656
    %v658 = vand.u32 %v35, 4294901760
    %v659 = vsub.f32 %v35, %v658
    %v660 = vand.u32 %v659, 4294901760
    %661 = vmatmul.mubr.f32.gmra.mxu0 %v660
    %v662 = vpop.f32.mrf.mxu0
    %v663 = vadd.f32 %v555, %v662
    %v664 = vpop.f32.mrf.mxu0
    %665 = vdwg.mxu0
    %666 = vmatprep.subr.mxu0 0.0
    %v667 = vand.u32 %v52, 4294901760
    %v668 = vsub.f32 %v52, %v667
    %v669 = vand.u32 %v668, 4294901760
    %670 = vmatpush1.msra.mxu0 %v669
    %671 = vmatprep.subr.mxu0 0.0
    %v672 = vand.u32 %v51, 4294901760
    %v673 = vsub.f32 %v51, %v672
    %v674 = vand.u32 %v673, 4294901760
    %675 = vmatpush1.msra.mxu0 %v674
    %676 = vmatprep.subr.mxu0 0.0
    %v677 = vand.u32 %v50, 4294901760
    %v678 = vsub.f32 %v50, %v677
    %v679 = vand.u32 %v678, 4294901760
    %680 = vmatpush1.msra.mxu0 %v679
    %681 = vmatprep.subr.mxu0 0.0
    %v682 = vand.u32 %v49, 4294901760
    %v683 = vsub.f32 %v49, %v682
    %v684 = vand.u32 %v683, 4294901760
    %685 = vmatpush1.msra.mxu0 %v684
    %686 = vmatprep.subr.mxu0 0.0
    %v687 = vand.u32 %v48, 4294901760
    %v688 = vsub.f32 %v48, %v687
    %v689 = vand.u32 %v688, 4294901760
    %690 = vmatpush1.msra.mxu0 %v689
    %691 = vmatprep.subr.mxu0 0.0
    %v692 = vand.u32 %v47, 4294901760
    %v693 = vsub.f32 %v47, %v692
    %v694 = vand.u32 %v693, 4294901760
    %695 = vmatpush1.msra.mxu0 %v694
    %696 = vmatprep.subr.mxu0 0.0
    %v697 = vand.u32 %v46, 4294901760
    %v698 = vsub.f32 %v46, %v697
    %v699 = vand.u32 %v698, 4294901760
    %700 = vmatpush1.msra.mxu0 %v699
    %701 = vmatprep.subr.mxu0 0.0
    %v702 = vand.u32 %v45, 4294901760
    %v703 = vsub.f32 %v45, %v702
    %v704 = vand.u32 %v703, 4294901760
    %705 = vmatpush1.msra.mxu0 %v704
    %706 = vmatprep.subr.mxu0 0.0
    %v707 = vand.u32 %v44, 4294901760
    %v708 = vsub.f32 %v44, %v707
    %v709 = vand.u32 %v708, 4294901760
    %710 = vmatpush1.msra.mxu0 %v709
    %711 = vmatprep.subr.mxu0 0.0
    %v712 = vand.u32 %v43, 4294901760
    %v713 = vsub.f32 %v43, %v712
    %v714 = vand.u32 %v713, 4294901760
    %715 = vmatpush1.msra.mxu0 %v714
    %716 = vmatprep.subr.mxu0 0.0
    %v717 = vand.u32 %v42, 4294901760
    %v718 = vsub.f32 %v42, %v717
    %v719 = vand.u32 %v718, 4294901760
    %720 = vmatpush1.msra.mxu0 %v719
    %721 = vmatprep.subr.mxu0 0.0
    %v722 = vand.u32 %v41, 4294901760
    %v723 = vsub.f32 %v41, %v722
    %v724 = vand.u32 %v723, 4294901760
    %725 = vmatpush1.msra.mxu0 %v724
    %726 = vmatprep.subr.mxu0 0.0
    %v727 = vand.u32 %v40, 4294901760
    %v728 = vsub.f32 %v40, %v727
    %v729 = vand.u32 %v728, 4294901760
    %730 = vmatpush1.msra.mxu0 %v729
    %731 = vmatprep.subr.mxu0 0.0
    %v732 = vand.u32 %v39, 4294901760
    %v733 = vsub.f32 %v39, %v732
    %v734 = vand.u32 %v733, 4294901760
    %735 = vmatpush1.msra.mxu0 %v734
    %736 = vmatprep.subr.mxu0 0.0
    %v737 = vand.u32 %v38, 4294901760
    %v738 = vsub.f32 %v38, %v737
    %v739 = vand.u32 %v738, 4294901760
    %740 = vmatpush1.msra.mxu0 %v739
    %741 = vmatprep.subr.mxu0 0.0
    %v742 = vand.u32 %v37, 4294901760
    %v743 = vsub.f32 %v37, %v742
    %v744 = vand.u32 %v743, 4294901760
    %745 = vmatpush1.msra.mxu0 %v744
    %746 = vmatprep.subr.mxu0 0.0
    %v747 = vand.u32 %v68, 4294901760
    %v748 = vsub.f32 %v68, %v747
    %v749 = vand.u32 %v748, 4294901760
    %750 = vmatpush2.msra.mxu0 %v749
    %751 = vmatprep.subr.mxu0 0.0
    %v752 = vand.u32 %v67, 4294901760
    %v753 = vsub.f32 %v67, %v752
    %v754 = vand.u32 %v753, 4294901760
    %755 = vmatpush2.msra.mxu0 %v754
    %756 = vmatprep.subr.mxu0 0.0
    %v757 = vand.u32 %v66, 4294901760
    %v758 = vsub.f32 %v66, %v757
    %v759 = vand.u32 %v758, 4294901760
    %760 = vmatpush2.msra.mxu0 %v759
    %761 = vmatprep.subr.mxu0 0.0
    %v762 = vand.u32 %v65, 4294901760
    %v763 = vsub.f32 %v65, %v762
    %v764 = vand.u32 %v763, 4294901760
    %765 = vmatpush2.msra.mxu0 %v764
    %766 = vmatprep.subr.mxu0 0.0
    %v767 = vand.u32 %v64, 4294901760
    %v768 = vsub.f32 %v64, %v767
    %v769 = vand.u32 %v768, 4294901760
    %770 = vmatpush2.msra.mxu0 %v769
    %771 = vmatprep.subr.mxu0 0.0
    %v772 = vand.u32 %v63, 4294901760
    %v773 = vsub.f32 %v63, %v772
    %v774 = vand.u32 %v773, 4294901760
    %775 = vmatpush2.msra.mxu0 %v774
    %776 = vmatprep.subr.mxu0 0.0
    %v777 = vand.u32 %v62, 4294901760
    %v778 = vsub.f32 %v62, %v777
    %v779 = vand.u32 %v778, 4294901760
    %780 = vmatpush2.msra.mxu0 %v779
    %781 = vmatprep.subr.mxu0 0.0
    %v782 = vand.u32 %v61, 4294901760
    %v783 = vsub.f32 %v61, %v782
    %v784 = vand.u32 %v783, 4294901760
    %785 = vmatpush2.msra.mxu0 %v784
    %786 = vmatprep.subr.mxu0 0.0
    %v787 = vand.u32 %v60, 4294901760
    %v788 = vsub.f32 %v60, %v787
    %v789 = vand.u32 %v788, 4294901760
    %790 = vmatpush2.msra.mxu0 %v789
    %791 = vmatprep.subr.mxu0 0.0
    %v792 = vand.u32 %v59, 4294901760
    %v793 = vsub.f32 %v59, %v792
    %v794 = vand.u32 %v793, 4294901760
    %795 = vmatpush2.msra.mxu0 %v794
    %796 = vmatprep.subr.mxu0 0.0
    %v797 = vand.u32 %v58, 4294901760
    %v798 = vsub.f32 %v58, %v797
    %v799 = vand.u32 %v798, 4294901760
    %800 = vmatpush2.msra.mxu0 %v799
    %801 = vmatprep.subr.mxu0 0.0
    %v802 = vand.u32 %v57, 4294901760
    %v803 = vsub.f32 %v57, %v802
    %v804 = vand.u32 %v803, 4294901760
    %805 = vmatpush2.msra.mxu0 %v804
    %806 = vmatprep.subr.mxu0 0.0
    %v807 = vand.u32 %v56, 4294901760
    %v808 = vsub.f32 %v56, %v807
    %v809 = vand.u32 %v808, 4294901760
    %810 = vmatpush2.msra.mxu0 %v809
    %811 = vmatprep.subr.mxu0 0.0
    %v812 = vand.u32 %v55, 4294901760
    %v813 = vsub.f32 %v55, %v812
    %v814 = vand.u32 %v813, 4294901760
    %815 = vmatpush2.msra.mxu0 %v814
    %816 = vmatprep.subr.mxu0 0.0
    %v817 = vand.u32 %v54, 4294901760
    %v818 = vsub.f32 %v54, %v817
    %v819 = vand.u32 %v818, 4294901760
    %820 = vmatpush2.msra.mxu0 %v819
    %821 = vmatprep.subr.mxu0 0.0
    %v822 = vand.u32 %v53, 4294901760
    %v823 = vsub.f32 %v53, %v822
    %v824 = vand.u32 %v823, 4294901760
    %825 = vmatpush2.msra.mxu0 %v824
    %v826 = vand.u32 %v36, 4294901760
    %827 = vmatprep.mubr.f32.mxu0 %v826
    %v828 = vand.u32 %v35, 4294901760
    %829 = vmatmul.mubr.f32.gmra.mxu0 %v828
    %v830 = vpop.f32.mrf.mxu0
    %v831 = vadd.f32 %v663, %v830
    %v832 = vpop.f32.mrf.mxu0
    %833 = vdwg.mxu0
    %834 = vmatprep.subr.mxu0 0.0
    %v835 = vand.u32 %v52, 4294901760
    %836 = vmatpush1.msra.mxu0 %v835
    %837 = vmatprep.subr.mxu0 0.0
    %v838 = vand.u32 %v51, 4294901760
    %839 = vmatpush1.msra.mxu0 %v838
    %840 = vmatprep.subr.mxu0 0.0
    %v841 = vand.u32 %v50, 4294901760
    %842 = vmatpush1.msra.mxu0 %v841
    %843 = vmatprep.subr.mxu0 0.0
    %v844 = vand.u32 %v49, 4294901760
    %845 = vmatpush1.msra.mxu0 %v844
    %846 = vmatprep.subr.mxu0 0.0
    %v847 = vand.u32 %v48, 4294901760
    %848 = vmatpush1.msra.mxu0 %v847
    %849 = vmatprep.subr.mxu0 0.0
    %v850 = vand.u32 %v47, 4294901760
    %851 = vmatpush1.msra.mxu0 %v850
    %852 = vmatprep.subr.mxu0 0.0
    %v853 = vand.u32 %v46, 4294901760
    %854 = vmatpush1.msra.mxu0 %v853
    %855 = vmatprep.subr.mxu0 0.0
    %v856 = vand.u32 %v45, 4294901760
    %857 = vmatpush1.msra.mxu0 %v856
    %858 = vmatprep.subr.mxu0 0.0
    %v859 = vand.u32 %v44, 4294901760
    %860 = vmatpush1.msra.mxu0 %v859
    %861 = vmatprep.subr.mxu0 0.0
    %v862 = vand.u32 %v43, 4294901760
    %863 = vmatpush1.msra.mxu0 %v862
    %864 = vmatprep.subr.mxu0 0.0
    %v865 = vand.u32 %v42, 4294901760
    %866 = vmatpush1.msra.mxu0 %v865
    %867 = vmatprep.subr.mxu0 0.0
    %v868 = vand.u32 %v41, 4294901760
    %869 = vmatpush1.msra.mxu0 %v868
    %870 = vmatprep.subr.mxu0 0.0
    %v871 = vand.u32 %v40, 4294901760
    %872 = vmatpush1.msra.mxu0 %v871
    %873 = vmatprep.subr.mxu0 0.0
    %v874 = vand.u32 %v39, 4294901760
    %875 = vmatpush1.msra.mxu0 %v874
    %876 = vmatprep.subr.mxu0 0.0
    %v877 = vand.u32 %v38, 4294901760
    %878 = vmatpush1.msra.mxu0 %v877
    %879 = vmatprep.subr.mxu0 0.0
    %v880 = vand.u32 %v37, 4294901760
    %881 = vmatpush1.msra.mxu0 %v880
    %882 = vmatprep.subr.mxu0 0.0
    %v883 = vand.u32 %v68, 4294901760
    %884 = vmatpush2.msra.mxu0 %v883
    %885 = vmatprep.subr.mxu0 0.0
    %v886 = vand.u32 %v67, 4294901760
    %887 = vmatpush2.msra.mxu0 %v886
    %888 = vmatprep.subr.mxu0 0.0
    %v889 = vand.u32 %v66, 4294901760
    %890 = vmatpush2.msra.mxu0 %v889
    %891 = vmatprep.subr.mxu0 0.0
    %v892 = vand.u32 %v65, 4294901760
    %893 = vmatpush2.msra.mxu0 %v892
    %894 = vmatprep.subr.mxu0 0.0
    %v895 = vand.u32 %v64, 4294901760
    %896 = vmatpush2.msra.mxu0 %v895
    %897 = vmatprep.subr.mxu0 0.0
    %v898 = vand.u32 %v63, 4294901760
    %899 = vmatpush2.msra.mxu0 %v898
    %900 = vmatprep.subr.mxu0 0.0
    %v901 = vand.u32 %v62, 4294901760
    %902 = vmatpush2.msra.mxu0 %v901
    %903 = vmatprep.subr.mxu0 0.0
    %v904 = vand.u32 %v61, 4294901760
    %905 = vmatpush2.msra.mxu0 %v904
    %906 = vmatprep.subr.mxu0 0.0
    %v907 = vand.u32 %v60, 4294901760
    %908 = vmatpush2.msra.mxu0 %v907
    %909 = vmatprep.subr.mxu0 0.0
    %v910 = vand.u32 %v59, 4294901760
    %911 = vmatpush2.msra.mxu0 %v910
    %912 = vmatprep.subr.mxu0 0.0
    %v913 = vand.u32 %v58, 4294901760
    %914 = vmatpush2.msra.mxu0 %v913
    %915 = vmatprep.subr.mxu0 0.0
    %v916 = vand.u32 %v57, 4294901760
    %917 = vmatpush2.msra.mxu0 %v916
    %918 = vmatprep.subr.mxu0 0.0
    %v919 = vand.u32 %v56, 4294901760
    %920 = vmatpush2.msra.mxu0 %v919
    %921 = vmatprep.subr.mxu0 0.0
    %v922 = vand.u32 %v55, 4294901760
    %923 = vmatpush2.msra.mxu0 %v922
    %924 = vmatprep.subr.mxu0 0.0
    %v925 = vand.u32 %v54, 4294901760
    %926 = vmatpush2.msra.mxu0 %v925
    %927 = vmatprep.subr.mxu0 0.0
    %v928 = vand.u32 %v53, 4294901760
    %929 = vmatpush2.msra.mxu0 %v928
    %v930 = vand.u32 %v36, 4294901760
    %931 = vmatprep.mubr.f32.mxu0 %v930
    %v932 = vand.u32 %v35, 4294901760
    %933 = vmatmul.mubr.f32.gmra.mxu0 %v932
    %v934 = vpop.f32.mrf.mxu0
    %v935 = vadd.f32 %v831, %v934
    %v936 = vpop.f32.mrf.mxu0
    %937 = vdwg.mxu0
    %v938 = vmax.f32 %v935, 0.0
    %v939 = vld [vmem:[%s3] sm:$0xff]
    %v940 = vld [vmem:[%s3 + $0x8] sm:$0xff]
    %v941 = vld [vmem:[%s3 + $0x10] sm:$0xff]
    %v942 = vld [vmem:[%s3 + $0x18] sm:$0xff]
    %v943 = vld [vmem:[%s3 + $0x20] sm:$0xff]
    %v944 = vld [vmem:[%s3 + $0x28] sm:$0xff]
    %v945 = vld [vmem:[%s3 + $0x30] sm:$0xff]
    %v946 = vld [vmem:[%s3 + $0x38] sm:$0xff]
    %v947 = vld [vmem:[%s3 + $0x40] sm:$0xff]
    %v948 = vld [vmem:[%s3 + $0x48] sm:$0xff]
    %v949 = vld [vmem:[%s3 + $0x50] sm:$0xff]
    %v950 = vld [vmem:[%s3 + $0x58] sm:$0xff]
    %v951 = vld [vmem:[%s3 + $0x60] sm:$0xff]
    %v952 = vld [vmem:[%s3 + $0x68] sm:$0xff]
    %v953 = vld [vmem:[%s3 + $0x70] sm:$0xff]
    %v954 = vld [vmem:[%s3 + $0x78] sm:$0xff]
    %v955 = vld [vmem:[%s4] sm:$0x1]
    %v957 = vlaneseq
    %v958 = vshrl.u32 %v957, 7
    %v959 = vsub.s32 0, %v958
    %v960 = vrot.slane %v955, %v959
    %962 = vmatprep.subr.mxu0 0.0
    %v963 = vand.u32 %v954, 4294901760
    %964 = vmatpush1.msra.mxu0 %v963
    %965 = vmatprep.subr.mxu0 0.0
    %v966 = vand.u32 %v953, 4294901760
    %967 = vmatpush1.msra.mxu0 %v966
    %968 = vmatprep.subr.mxu0 0.0
    %v969 = vand.u32 %v952, 4294901760
    %970 = vmatpush1.msra.mxu0 %v969
    %971 = vmatprep.subr.mxu0 0.0
    %v972 = vand.u32 %v951, 4294901760
    %973 = vmatpush1.msra.mxu0 %v972
    %974 = vmatprep.subr.mxu0 0.0
    %v975 = vand.u32 %v950, 4294901760
    %976 = vmatpush1.msra.mxu0 %v975
    %977 = vmatprep.subr.mxu0 0.0
    %v978 = vand.u32 %v949, 4294901760
    %979 = vmatpush1.msra.mxu0 %v978
    %980 = vmatprep.subr.mxu0 0.0
    %v981 = vand.u32 %v948, 4294901760
    %982 = vmatpush1.msra.mxu0 %v981
    %983 = vmatprep.subr.mxu0 0.0
    %v984 = vand.u32 %v947, 4294901760
    %985 = vmatpush1.msra.mxu0 %v984
    %986 = vmatprep.subr.mxu0 0.0
    %v987 = vand.u32 %v946, 4294901760
    %988 = vmatpush1.msra.mxu0 %v987
    %989 = vmatprep.subr.mxu0 0.0
    %v990 = vand.u32 %v945, 4294901760
    %991 = vmatpush1.msra.mxu0 %v990
    %992 = vmatprep.subr.mxu0 0.0
    %v993 = vand.u32 %v944, 4294901760
    %994 = vmatpush1.msra.mxu0 %v993
    %995 = vmatprep.subr.mxu0 0.0
    %v996 = vand.u32 %v943, 4294901760
    %997 = vmatpush1.msra.mxu0 %v996
    %998 = vmatprep.subr.mxu0 0.0
    %v999 = vand.u32 %v942, 4294901760
    %1000 = vmatpush1.msra.mxu0 %v999
    %1001 = vmatprep.subr.mxu0 0.0
    %v1002 = vand.u32 %v941, 4294901760
    %1003 = vmatpush1.msra.mxu0 %v1002
    %1004 = vmatprep.subr.mxu0 0.0
    %v1005 = vand.u32 %v940, 4294901760
    %1006 = vmatpush1.msra.mxu0 %v1005
    %1007 = vmatprep.subr.mxu0 0.0
    %v1008 = vand.u32 %v939, 4294901760
    %1009 = vmatpush1.msra.mxu0 %v1008
    %1010 = vmatprep.subr.mxu0 0.0
    %1011 = vmatpush2.msra.mxu0 0.0
    %1012 = vmatprep.subr.mxu0 0.0
    %1013 = vmatpush2.msra.mxu0 0.0
    %1014 = vmatprep.subr.mxu0 0.0
    %1015 = vmatpush2.msra.mxu0 0.0
    %1016 = vmatprep.subr.mxu0 0.0
    %1017 = vmatpush2.msra.mxu0 0.0
    %1018 = vmatprep.subr.mxu0 0.0
    %1019 = vmatpush2.msra.mxu0 0.0
    %1020 = vmatprep.subr.mxu0 0.0
    %1021 = vmatpush2.msra.mxu0 0.0
    %1022 = vmatprep.subr.mxu0 0.0
    %1023 = vmatpush2.msra.mxu0 0.0
    %1024 = vmatprep.subr.mxu0 0.0
    %1025 = vmatpush2.msra.mxu0 0.0
    %1026 = vmatprep.subr.mxu0 0.0
    %1027 = vmatpush2.msra.mxu0 0.0
    %1028 = vmatprep.subr.mxu0 0.0
    %1029 = vmatpush2.msra.mxu0 0.0
    %1030 = vmatprep.subr.mxu0 0.0
    %1031 = vmatpush2.msra.mxu0 0.0
    %1032 = vmatprep.subr.mxu0 0.0
    %1033 = vmatpush2.msra.mxu0 0.0
    %1034 = vmatprep.subr.mxu0 0.0
    %1035 = vmatpush2.msra.mxu0 0.0
    %1036 = vmatprep.subr.mxu0 0.0
    %1037 = vmatpush2.msra.mxu0 0.0
    %1038 = vmatprep.subr.mxu0 0.0
    %1039 = vmatpush2.msra.mxu0 0.0
    %1040 = vmatprep.subr.mxu0 0.0
    %1041 = vmatpush2.msra.mxu0 0.0
    %1042 = vmatprep.mubr.f32.mxu0 0.0
    %v1043 = vand.u32 %v938, 4294901760
    %v1044 = vsub.f32 %v938, %v1043
    %v1045 = vand.u32 %v1044, 4294901760
    %v1046 = vsub.f32 %v1044, %v1045
    %v1047 = vand.u32 %v1046, 4294901760
    %1048 = vmatmul.mubr.f32.gmra.mxu0 %v1047
    %v1049 = vpop.f32.mrf.mxu0
    %v1050 = vadd.f32 %v960, %v1049
    %v1051 = vpop.f32.mrf.mxu0
    %1052 = vdwg.mxu0
    %1053 = vmatprep.subr.mxu0 0.0
    %v1054 = vand.u32 %v954, 4294901760
    %v1055 = vsub.f32 %v954, %v1054
    %v1056 = vand.u32 %v1055, 4294901760
    %v1057 = vsub.f32 %v1055, %v1056
    %v1058 = vand.u32 %v1057, 4294901760
    %1059 = vmatpush1.msra.mxu0 %v1058
    %1060 = vmatprep.subr.mxu0 0.0
    %v1061 = vand.u32 %v953, 4294901760
    %v1062 = vsub.f32 %v953, %v1061
    %v1063 = vand.u32 %v1062, 4294901760
    %v1064 = vsub.f32 %v1062, %v1063
    %v1065 = vand.u32 %v1064, 4294901760
    %1066 = vmatpush1.msra.mxu0 %v1065
    %1067 = vmatprep.subr.mxu0 0.0
    %v1068 = vand.u32 %v952, 4294901760
    %v1069 = vsub.f32 %v952, %v1068
    %v1070 = vand.u32 %v1069, 4294901760
    %v1071 = vsub.f32 %v1069, %v1070
    %v1072 = vand.u32 %v1071, 4294901760
    %1073 = vmatpush1.msra.mxu0 %v1072
    %1074 = vmatprep.subr.mxu0 0.0
    %v1075 = vand.u32 %v951, 4294901760
    %v1076 = vsub.f32 %v951, %v1075
    %v1077 = vand.u32 %v1076, 4294901760
    %v1078 = vsub.f32 %v1076, %v1077
    %v1079 = vand.u32 %v1078, 4294901760
    %1080 = vmatpush1.msra.mxu0 %v1079
    %1081 = vmatprep.subr.mxu0 0.0
    %v1082 = vand.u32 %v950, 4294901760
    %v1083 = vsub.f32 %v950, %v1082
    %v1084 = vand.u32 %v1083, 4294901760
    %v1085 = vsub.f32 %v1083, %v1084
    %v1086 = vand.u32 %v1085, 4294901760
    %1087 = vmatpush1.msra.mxu0 %v1086
    %1088 = vmatprep.subr.mxu0 0.0
    %v1089 = vand.u32 %v949, 4294901760
    %v1090 = vsub.f32 %v949, %v1089
    %v1091 = vand.u32 %v1090, 4294901760
    %v1092 = vsub.f32 %v1090, %v1091
    %v1093 = vand.u32 %v1092, 4294901760
    %1094 = vmatpush1.msra.mxu0 %v1093
    %1095 = vmatprep.subr.mxu0 0.0
    %v1096 = vand.u32 %v948, 4294901760
    %v1097 = vsub.f32 %v948, %v1096
    %v1098 = vand.u32 %v1097, 4294901760
    %v1099 = vsub.f32 %v1097, %v1098
    %v1100 = vand.u32 %v1099, 4294901760
    %1101 = vmatpush1.msra.mxu0 %v1100
    %1102 = vmatprep.subr.mxu0 0.0
    %v1103 = vand.u32 %v947, 4294901760
    %v1104 = vsub.f32 %v947, %v1103
    %v1105 = vand.u32 %v1104, 4294901760
    %v1106 = vsub.f32 %v1104, %v1105
    %v1107 = vand.u32 %v1106, 4294901760
    %1108 = vmatpush1.msra.mxu0 %v1107
    %1109 = vmatprep.subr.mxu0 0.0
    %v1110 = vand.u32 %v946, 4294901760
    %v1111 = vsub.f32 %v946, %v1110
    %v1112 = vand.u32 %v1111, 4294901760
    %v1113 = vsub.f32 %v1111, %v1112
    %v1114 = vand.u32 %v1113, 4294901760
    %1115 = vmatpush1.msra.mxu0 %v1114
    %1116 = vmatprep.subr.mxu0 0.0
    %v1117 = vand.u32 %v945, 4294901760
    %v1118 = vsub.f32 %v945, %v1117
    %v1119 = vand.u32 %v1118, 4294901760
    %v1120 = vsub.f32 %v1118, %v1119
    %v1121 = vand.u32 %v1120, 4294901760
    %1122 = vmatpush1.msra.mxu0 %v1121
    %1123 = vmatprep.subr.mxu0 0.0
    %v1124 = vand.u32 %v944, 4294901760
    %v1125 = vsub.f32 %v944, %v1124
    %v1126 = vand.u32 %v1125, 4294901760
    %v1127 = vsub.f32 %v1125, %v1126
    %v1128 = vand.u32 %v1127, 4294901760
    %1129 = vmatpush1.msra.mxu0 %v1128
    %1130 = vmatprep.subr.mxu0 0.0
    %v1131 = vand.u32 %v943, 4294901760
    %v1132 = vsub.f32 %v943, %v1131
    %v1133 = vand.u32 %v1132, 4294901760
    %v1134 = vsub.f32 %v1132, %v1133
    %v1135 = vand.u32 %v1134, 4294901760
    %1136 = vmatpush1.msra.mxu0 %v1135
    %1137 = vmatprep.subr.mxu0 0.0
    %v1138 = vand.u32 %v942, 4294901760
    %v1139 = vsub.f32 %v942, %v1138
    %v1140 = vand.u32 %v1139, 4294901760
    %v1141 = vsub.f32 %v1139, %v1140
    %v1142 = vand.u32 %v1141, 4294901760
    %1143 = vmatpush1.msra.mxu0 %v1142
    %1144 = vmatprep.subr.mxu0 0.0
    %v1145 = vand.u32 %v941, 4294901760
    %v1146 = vsub.f32 %v941, %v1145
    %v1147 = vand.u32 %v1146, 4294901760
    %v1148 = vsub.f32 %v1146, %v1147
    %v1149 = vand.u32 %v1148, 4294901760
    %1150 = vmatpush1.msra.mxu0 %v1149
    %1151 = vmatprep.subr.mxu0 0.0
    %v1152 = vand.u32 %v940, 4294901760
    %v1153 = vsub.f32 %v940, %v1152
    %v1154 = vand.u32 %v1153, 4294901760
    %v1155 = vsub.f32 %v1153, %v1154
    %v1156 = vand.u32 %v1155, 4294901760
    %1157 = vmatpush1.msra.mxu0 %v1156
    %1158 = vmatprep.subr.mxu0 0.0
    %v1159 = vand.u32 %v939, 4294901760
    %v1160 = vsub.f32 %v939, %v1159
    %v1161 = vand.u32 %v1160, 4294901760
    %v1162 = vsub.f32 %v1160, %v1161
    %v1163 = vand.u32 %v1162, 4294901760
    %1164 = vmatpush1.msra.mxu0 %v1163
    %1165 = vmatprep.subr.mxu0 0.0
    %1166 = vmatpush2.msra.mxu0 0.0
    %1167 = vmatprep.subr.mxu0 0.0
    %1168 = vmatpush2.msra.mxu0 0.0
    %1169 = vmatprep.subr.mxu0 0.0
    %1170 = vmatpush2.msra.mxu0 0.0
    %1171 = vmatprep.subr.mxu0 0.0
    %1172 = vmatpush2.msra.mxu0 0.0
    %1173 = vmatprep.subr.mxu0 0.0
    %1174 = vmatpush2.msra.mxu0 0.0
    %1175 = vmatprep.subr.mxu0 0.0
    %1176 = vmatpush2.msra.mxu0 0.0
    %1177 = vmatprep.subr.mxu0 0.0
    %1178 = vmatpush2.msra.mxu0 0.0
    %1179 = vmatprep.subr.mxu0 0.0
    %1180 = vmatpush2.msra.mxu0 0.0
    %1181 = vmatprep.subr.mxu0 0.0
    %1182 = vmatpush2.msra.mxu0 0.0
    %1183 = vmatprep.subr.mxu0 0.0
    %1184 = vmatpush2.msra.mxu0 0.0
    %1185 = vmatprep.subr.mxu0 0.0
    %1186 = vmatpush2.msra.mxu0 0.0
    %1187 = vmatprep.subr.mxu0 0.0
    %1188 = vmatpush2.msra.mxu0 0.0
    %1189 = vmatprep.subr.mxu0 0.0
    %1190 = vmatpush2.msra.mxu0 0.0
    %1191 = vmatprep.subr.mxu0 0.0
    %1192 = vmatpush2.msra.mxu0 0.0
    %1193 = vmatprep.subr.mxu0 0.0
    %1194 = vmatpush2.msra.mxu0 0.0
    %1195 = vmatprep.subr.mxu0 0.0
    %1196 = vmatpush2.msra.mxu0 0.0
    %1197 = vmatprep.mubr.f32.mxu0 0.0
    %v1198 = vand.u32 %v938, 4294901760
    %1199 = vmatmul.mubr.f32.gmra.mxu0 %v1198
    %v1200 = vpop.f32.mrf.mxu0
    %v1201 = vadd.f32 %v1050, %v1200
    %v1202 = vpop.f32.mrf.mxu0
    %1203 = vdwg.mxu0
    %1204 = vmatprep.subr.mxu0 0.0
    %v1205 = vand.u32 %v954, 4294901760
    %v1206 = vsub.f32 %v954, %v1205
    %1207 = vmatpush1.msra.mxu0 %v1206
    %1208 = vmatprep.subr.mxu0 0.0
    %v1209 = vand.u32 %v953, 4294901760
    %v1210 = vsub.f32 %v953, %v1209
    %1211 = vmatpush1.msra.mxu0 %v1210
    %1212 = vmatprep.subr.mxu0 0.0
    %v1213 = vand.u32 %v952, 4294901760
    %v1214 = vsub.f32 %v952, %v1213
    %1215 = vmatpush1.msra.mxu0 %v1214
    %1216 = vmatprep.subr.mxu0 0.0
    %v1217 = vand.u32 %v951, 4294901760
    %v1218 = vsub.f32 %v951, %v1217
    %1219 = vmatpush1.msra.mxu0 %v1218
    %1220 = vmatprep.subr.mxu0 0.0
    %v1221 = vand.u32 %v950, 4294901760
    %v1222 = vsub.f32 %v950, %v1221
    %1223 = vmatpush1.msra.mxu0 %v1222
    %1224 = vmatprep.subr.mxu0 0.0
    %v1225 = vand.u32 %v949, 4294901760
    %v1226 = vsub.f32 %v949, %v1225
    %1227 = vmatpush1.msra.mxu0 %v1226
    %1228 = vmatprep.subr.mxu0 0.0
    %v1229 = vand.u32 %v948, 4294901760
    %v1230 = vsub.f32 %v948, %v1229
    %1231 = vmatpush1.msra.mxu0 %v1230
    %1232 = vmatprep.subr.mxu0 0.0
    %v1233 = vand.u32 %v947, 4294901760
    %v1234 = vsub.f32 %v947, %v1233
    %1235 = vmatpush1.msra.mxu0 %v1234
    %1236 = vmatprep.subr.mxu0 0.0
    %v1237 = vand.u32 %v946, 4294901760
    %v1238 = vsub.f32 %v946, %v1237
    %1239 = vmatpush1.msra.mxu0 %v1238
    %1240 = vmatprep.subr.mxu0 0.0
    %v1241 = vand.u32 %v945, 4294901760
    %v1242 = vsub.f32 %v945, %v1241
    %1243 = vmatpush1.msra.mxu0 %v1242
    %1244 = vmatprep.subr.mxu0 0.0
    %v1245 = vand.u32 %v944, 4294901760
    %v1246 = vsub.f32 %v944, %v1245
    %1247 = vmatpush1.msra.mxu0 %v1246
    %1248 = vmatprep.subr.mxu0 0.0
    %v1249 = vand.u32 %v943, 4294901760
    %v1250 = vsub.f32 %v943, %v1249
    %1251 = vmatpush1.msra.mxu0 %v1250
    %1252 = vmatprep.subr.mxu0 0.0
    %v1253 = vand.u32 %v942, 4294901760
    %v1254 = vsub.f32 %v942, %v1253
    %1255 = vmatpush1.msra.mxu0 %v1254
    %1256 = vmatprep.subr.mxu0 0.0
    %v1257 = vand.u32 %v941, 4294901760
    %v1258 = vsub.f32 %v941, %v1257
    %1259 = vmatpush1.msra.mxu0 %v1258
    %1260 = vmatprep.subr.mxu0 0.0
    %v1261 = vand.u32 %v940, 4294901760
    %v1262 = vsub.f32 %v940, %v1261
    %1263 = vmatpush1.msra.mxu0 %v1262
    %1264 = vmatprep.subr.mxu0 0.0
    %v1265 = vand.u32 %v939, 4294901760
    %v1266 = vsub.f32 %v939, %v1265
    %1267 = vmatpush1.msra.mxu0 %v1266
    %1268 = vmatprep.subr.mxu0 0.0
    %1269 = vmatpush2.msra.mxu0 0.0
    %1270 = vmatprep.subr.mxu0 0.0
    %1271 = vmatpush2.msra.mxu0 0.0
    %1272 = vmatprep.subr.mxu0 0.0
    %1273 = vmatpush2.msra.mxu0 0.0
    %1274 = vmatprep.subr.mxu0 0.0
    %1275 = vmatpush2.msra.mxu0 0.0
    %1276 = vmatprep.subr.mxu0 0.0
    %1277 = vmatpush2.msra.mxu0 0.0
    %1278 = vmatprep.subr.mxu0 0.0
    %1279 = vmatpush2.msra.mxu0 0.0
    %1280 = vmatprep.subr.mxu0 0.0
    %1281 = vmatpush2.msra.mxu0 0.0
    %1282 = vmatprep.subr.mxu0 0.0
    %1283 = vmatpush2.msra.mxu0 0.0
    %1284 = vmatprep.subr.mxu0 0.0
    %1285 = vmatpush2.msra.mxu0 0.0
    %1286 = vmatprep.subr.mxu0 0.0
    %1287 = vmatpush2.msra.mxu0 0.0
    %1288 = vmatprep.subr.mxu0 0.0
    %1289 = vmatpush2.msra.mxu0 0.0
    %1290 = vmatprep.subr.mxu0 0.0
    %1291 = vmatpush2.msra.mxu0 0.0
    %1292 = vmatprep.subr.mxu0 0.0
    %1293 = vmatpush2.msra.mxu0 0.0
    %1294 = vmatprep.subr.mxu0 0.0
    %1295 = vmatpush2.msra.mxu0 0.0
    %1296 = vmatprep.subr.mxu0 0.0
    %1297 = vmatpush2.msra.mxu0 0.0
    %1298 = vmatprep.subr.mxu0 0.0
    %1299 = vmatpush2.msra.mxu0 0.0
    %1300 = vmatprep.mubr.f32.mxu0 0.0
    %v1301 = vand.u32 %v938, 4294901760
    %v1302 = vsub.f32 %v938, %v1301
    %1303 = vmatmul.mubr.f32.gmra.mxu0 %v1302
    %v1304 = vpop.f32.mrf.mxu0
    %v1305 = vadd.f32 %v1201, %v1304
    %v1306 = vpop.f32.mrf.mxu0
    %1307 = vdwg.mxu0
    %1308 = vmatprep.subr.mxu0 0.0
    %v1309 = vand.u32 %v954, 4294901760
    %1310 = vmatpush1.msra.mxu0 %v1309
    %1311 = vmatprep.subr.mxu0 0.0
    %v1312 = vand.u32 %v953, 4294901760
    %1313 = vmatpush1.msra.mxu0 %v1312
    %1314 = vmatprep.subr.mxu0 0.0
    %v1315 = vand.u32 %v952, 4294901760
    %1316 = vmatpush1.msra.mxu0 %v1315
    %1317 = vmatprep.subr.mxu0 0.0
    %v1318 = vand.u32 %v951, 4294901760
    %1319 = vmatpush1.msra.mxu0 %v1318
    %1320 = vmatprep.subr.mxu0 0.0
    %v1321 = vand.u32 %v950, 4294901760
    %1322 = vmatpush1.msra.mxu0 %v1321
    %1323 = vmatprep.subr.mxu0 0.0
    %v1324 = vand.u32 %v949, 4294901760
    %1325 = vmatpush1.msra.mxu0 %v1324
    %1326 = vmatprep.subr.mxu0 0.0
    %v1327 = vand.u32 %v948, 4294901760
    %1328 = vmatpush1.msra.mxu0 %v1327
    %1329 = vmatprep.subr.mxu0 0.0
    %v1330 = vand.u32 %v947, 4294901760
    %1331 = vmatpush1.msra.mxu0 %v1330
    %1332 = vmatprep.subr.mxu0 0.0
    %v1333 = vand.u32 %v946, 4294901760
    %1334 = vmatpush1.msra.mxu0 %v1333
    %1335 = vmatprep.subr.mxu0 0.0
    %v1336 = vand.u32 %v945, 4294901760
    %1337 = vmatpush1.msra.mxu0 %v1336
    %1338 = vmatprep.subr.mxu0 0.0
    %v1339 = vand.u32 %v944, 4294901760
    %1340 = vmatpush1.msra.mxu0 %v1339
    %1341 = vmatprep.subr.mxu0 0.0
    %v1342 = vand.u32 %v943, 4294901760
    %1343 = vmatpush1.msra.mxu0 %v1342
    %1344 = vmatprep.subr.mxu0 0.0
    %v1345 = vand.u32 %v942, 4294901760
    %1346 = vmatpush1.msra.mxu0 %v1345
    %1347 = vmatprep.subr.mxu0 0.0
    %v1348 = vand.u32 %v941, 4294901760
    %1349 = vmatpush1.msra.mxu0 %v1348
    %1350 = vmatprep.subr.mxu0 0.0
    %v1351 = vand.u32 %v940, 4294901760
    %1352 = vmatpush1.msra.mxu0 %v1351
    %1353 = vmatprep.subr.mxu0 0.0
    %v1354 = vand.u32 %v939, 4294901760
    %1355 = vmatpush1.msra.mxu0 %v1354
    %1356 = vmatprep.subr.mxu0 0.0
    %1357 = vmatpush2.msra.mxu0 0.0
    %1358 = vmatprep.subr.mxu0 0.0
    %1359 = vmatpush2.msra.mxu0 0.0
    %1360 = vmatprep.subr.mxu0 0.0
    %1361 = vmatpush2.msra.mxu0 0.0
    %1362 = vmatprep.subr.mxu0 0.0
    %1363 = vmatpush2.msra.mxu0 0.0
    %1364 = vmatprep.subr.mxu0 0.0
    %1365 = vmatpush2.msra.mxu0 0.0
    %1366 = vmatprep.subr.mxu0 0.0
    %1367 = vmatpush2.msra.mxu0 0.0
    %1368 = vmatprep.subr.mxu0 0.0
    %1369 = vmatpush2.msra.mxu0 0.0
    %1370 = vmatprep.subr.mxu0 0.0
    %1371 = vmatpush2.msra.mxu0 0.0
    %1372 = vmatprep.subr.mxu0 0.0
    %1373 = vmatpush2.msra.mxu0 0.0
    %1374 = vmatprep.subr.mxu0 0.0
    %1375 = vmatpush2.msra.mxu0 0.0
    %1376 = vmatprep.subr.mxu0 0.0
    %1377 = vmatpush2.msra.mxu0 0.0
    %1378 = vmatprep.subr.mxu0 0.0
    %1379 = vmatpush2.msra.mxu0 0.0
    %1380 = vmatprep.subr.mxu0 0.0
    %1381 = vmatpush2.msra.mxu0 0.0
    %1382 = vmatprep.subr.mxu0 0.0
    %1383 = vmatpush2.msra.mxu0 0.0
    %1384 = vmatprep.subr.mxu0 0.0
    %1385 = vmatpush2.msra.mxu0 0.0
    %1386 = vmatprep.subr.mxu0 0.0
    %1387 = vmatpush2.msra.mxu0 0.0
    %1388 = vmatprep.mubr.f32.mxu0 0.0
    %v1389 = vand.u32 %v938, 4294901760
    %v1390 = vsub.f32 %v938, %v1389
    %v1391 = vand.u32 %v1390, 4294901760
    %1392 = vmatmul.mubr.f32.gmra.mxu0 %v1391
    %v1393 = vpop.f32.mrf.mxu0
    %v1394 = vadd.f32 %v1305, %v1393
    %v1395 = vpop.f32.mrf.mxu0
    %1396 = vdwg.mxu0
    %1397 = vmatprep.subr.mxu0 0.0
    %v1398 = vand.u32 %v954, 4294901760
    %v1399 = vsub.f32 %v954, %v1398
    %v1400 = vand.u32 %v1399, 4294901760
    %1401 = vmatpush1.msra.mxu0 %v1400
    %1402 = vmatprep.subr.mxu0 0.0
    %v1403 = vand.u32 %v953, 4294901760
    %v1404 = vsub.f32 %v953, %v1403
    %v1405 = vand.u32 %v1404, 4294901760
    %1406 = vmatpush1.msra.mxu0 %v1405
    %1407 = vmatprep.subr.mxu0 0.0
    %v1408 = vand.u32 %v952, 4294901760
    %v1409 = vsub.f32 %v952, %v1408
    %v1410 = vand.u32 %v1409, 4294901760
    %1411 = vmatpush1.msra.mxu0 %v1410
    %1412 = vmatprep.subr.mxu0 0.0
    %v1413 = vand.u32 %v951, 4294901760
    %v1414 = vsub.f32 %v951, %v1413
    %v1415 = vand.u32 %v1414, 4294901760
    %1416 = vmatpush1.msra.mxu0 %v1415
    %1417 = vmatprep.subr.mxu0 0.0
    %v1418 = vand.u32 %v950, 4294901760
    %v1419 = vsub.f32 %v950, %v1418
    %v1420 = vand.u32 %v1419, 4294901760
    %1421 = vmatpush1.msra.mxu0 %v1420
    %1422 = vmatprep.subr.mxu0 0.0
    %v1423 = vand.u32 %v949, 4294901760
    %v1424 = vsub.f32 %v949, %v1423
    %v1425 = vand.u32 %v1424, 4294901760
    %1426 = vmatpush1.msra.mxu0 %v1425
    %1427 = vmatprep.subr.mxu0 0.0
    %v1428 = vand.u32 %v948, 4294901760
    %v1429 = vsub.f32 %v948, %v1428
    %v1430 = vand.u32 %v1429, 4294901760
    %1431 = vmatpush1.msra.mxu0 %v1430
    %1432 = vmatprep.subr.mxu0 0.0
    %v1433 = vand.u32 %v947, 4294901760
    %v1434 = vsub.f32 %v947, %v1433
    %v1435 = vand.u32 %v1434, 4294901760
    %1436 = vmatpush1.msra.mxu0 %v1435
    %1437 = vmatprep.subr.mxu0 0.0
    %v1438 = vand.u32 %v946, 4294901760
    %v1439 = vsub.f32 %v946, %v1438
    %v1440 = vand.u32 %v1439, 4294901760
    %1441 = vmatpush1.msra.mxu0 %v1440
    %1442 = vmatprep.subr.mxu0 0.0
    %v1443 = vand.u32 %v945, 4294901760
    %v1444 = vsub.f32 %v945, %v1443
    %v1445 = vand.u32 %v1444, 4294901760
    %1446 = vmatpush1.msra.mxu0 %v1445
    %1447 = vmatprep.subr.mxu0 0.0
    %v1448 = vand.u32 %v944, 4294901760
    %v1449 = vsub.f32 %v944, %v1448
    %v1450 = vand.u32 %v1449, 4294901760
    %1451 = vmatpush1.msra.mxu0 %v1450
    %1452 = vmatprep.subr.mxu0 0.0
    %v1453 = vand.u32 %v943, 4294901760
    %v1454 = vsub.f32 %v943, %v1453
    %v1455 = vand.u32 %v1454, 4294901760
    %1456 = vmatpush1.msra.mxu0 %v1455
    %1457 = vmatprep.subr.mxu0 0.0
    %v1458 = vand.u32 %v942, 4294901760
    %v1459 = vsub.f32 %v942, %v1458
    %v1460 = vand.u32 %v1459, 4294901760
    %1461 = vmatpush1.msra.mxu0 %v1460
    %1462 = vmatprep.subr.mxu0 0.0
    %v1463 = vand.u32 %v941, 4294901760
    %v1464 = vsub.f32 %v941, %v1463
    %v1465 = vand.u32 %v1464, 4294901760
    %1466 = vmatpush1.msra.mxu0 %v1465
    %1467 = vmatprep.subr.mxu0 0.0
    %v1468 = vand.u32 %v940, 4294901760
    %v1469 = vsub.f32 %v940, %v1468
    %v1470 = vand.u32 %v1469, 4294901760
    %1471 = vmatpush1.msra.mxu0 %v1470
    %1472 = vmatprep.subr.mxu0 0.0
    %v1473 = vand.u32 %v939, 4294901760
    %v1474 = vsub.f32 %v939, %v1473
    %v1475 = vand.u32 %v1474, 4294901760
    %1476 = vmatpush1.msra.mxu0 %v1475
    %1477 = vmatprep.subr.mxu0 0.0
    %1478 = vmatpush2.msra.mxu0 0.0
    %1479 = vmatprep.subr.mxu0 0.0
    %1480 = vmatpush2.msra.mxu0 0.0
    %1481 = vmatprep.subr.mxu0 0.0
    %1482 = vmatpush2.msra.mxu0 0.0
    %1483 = vmatprep.subr.mxu0 0.0
    %1484 = vmatpush2.msra.mxu0 0.0
    %1485 = vmatprep.subr.mxu0 0.0
    %1486 = vmatpush2.msra.mxu0 0.0
    %1487 = vmatprep.subr.mxu0 0.0
    %1488 = vmatpush2.msra.mxu0 0.0
    %1489 = vmatprep.subr.mxu0 0.0
    %1490 = vmatpush2.msra.mxu0 0.0
    %1491 = vmatprep.subr.mxu0 0.0
    %1492 = vmatpush2.msra.mxu0 0.0
    %1493 = vmatprep.subr.mxu0 0.0
    %1494 = vmatpush2.msra.mxu0 0.0
    %1495 = vmatprep.subr.mxu0 0.0
    %1496 = vmatpush2.msra.mxu0 0.0
    %1497 = vmatprep.subr.mxu0 0.0
    %1498 = vmatpush2.msra.mxu0 0.0
    %1499 = vmatprep.subr.mxu0 0.0
    %1500 = vmatpush2.msra.mxu0 0.0
    %1501 = vmatprep.subr.mxu0 0.0
    %1502 = vmatpush2.msra.mxu0 0.0
    %1503 = vmatprep.subr.mxu0 0.0
    %1504 = vmatpush2.msra.mxu0 0.0
    %1505 = vmatprep.subr.mxu0 0.0
    %1506 = vmatpush2.msra.mxu0 0.0
    %1507 = vmatprep.subr.mxu0 0.0
    %1508 = vmatpush2.msra.mxu0 0.0
    %1509 = vmatprep.mubr.f32.mxu0 0.0
    %v1510 = vand.u32 %v938, 4294901760
    %1511 = vmatmul.mubr.f32.gmra.mxu0 %v1510
    %v1512 = vpop.f32.mrf.mxu0
    %v1513 = vadd.f32 %v1394, %v1512
    %v1514 = vpop.f32.mrf.mxu0
    %1515 = vdwg.mxu0
    %1516 = vmatprep.subr.mxu0 0.0
    %v1517 = vand.u32 %v954, 4294901760
    %1518 = vmatpush1.msra.mxu0 %v1517
    %1519 = vmatprep.subr.mxu0 0.0
    %v1520 = vand.u32 %v953, 4294901760
    %1521 = vmatpush1.msra.mxu0 %v1520
    %1522 = vmatprep.subr.mxu0 0.0
    %v1523 = vand.u32 %v952, 4294901760
    %1524 = vmatpush1.msra.mxu0 %v1523
    %1525 = vmatprep.subr.mxu0 0.0
    %v1526 = vand.u32 %v951, 4294901760
    %1527 = vmatpush1.msra.mxu0 %v1526
    %1528 = vmatprep.subr.mxu0 0.0
    %v1529 = vand.u32 %v950, 4294901760
    %1530 = vmatpush1.msra.mxu0 %v1529
    %1531 = vmatprep.subr.mxu0 0.0
    %v1532 = vand.u32 %v949, 4294901760
    %1533 = vmatpush1.msra.mxu0 %v1532
    %1534 = vmatprep.subr.mxu0 0.0
    %v1535 = vand.u32 %v948, 4294901760
    %1536 = vmatpush1.msra.mxu0 %v1535
    %1537 = vmatprep.subr.mxu0 0.0
    %v1538 = vand.u32 %v947, 4294901760
    %1539 = vmatpush1.msra.mxu0 %v1538
    %1540 = vmatprep.subr.mxu0 0.0
    %v1541 = vand.u32 %v946, 4294901760
    %1542 = vmatpush1.msra.mxu0 %v1541
    %1543 = vmatprep.subr.mxu0 0.0
    %v1544 = vand.u32 %v945, 4294901760
    %1545 = vmatpush1.msra.mxu0 %v1544
    %1546 = vmatprep.subr.mxu0 0.0
    %v1547 = vand.u32 %v944, 4294901760
    %1548 = vmatpush1.msra.mxu0 %v1547
    %1549 = vmatprep.subr.mxu0 0.0
    %v1550 = vand.u32 %v943, 4294901760
    %1551 = vmatpush1.msra.mxu0 %v1550
    %1552 = vmatprep.subr.mxu0 0.0
    %v1553 = vand.u32 %v942, 4294901760
    %1554 = vmatpush1.msra.mxu0 %v1553
    %1555 = vmatprep.subr.mxu0 0.0
    %v1556 = vand.u32 %v941, 4294901760
    %1557 = vmatpush1.msra.mxu0 %v1556
    %1558 = vmatprep.subr.mxu0 0.0
    %v1559 = vand.u32 %v940, 4294901760
    %1560 = vmatpush1.msra.mxu0 %v1559
    %1561 = vmatprep.subr.mxu0 0.0
    %v1562 = vand.u32 %v939, 4294901760
    %1563 = vmatpush1.msra.mxu0 %v1562
    %1564 = vmatprep.subr.mxu0 0.0
    %1565 = vmatpush2.msra.mxu0 0.0
    %1566 = vmatprep.subr.mxu0 0.0
    %1567 = vmatpush2.msra.mxu0 0.0
    %1568 = vmatprep.subr.mxu0 0.0
    %1569 = vmatpush2.msra.mxu0 0.0
    %1570 = vmatprep.subr.mxu0 0.0
    %1571 = vmatpush2.msra.mxu0 0.0
    %1572 = vmatprep.subr.mxu0 0.0
    %1573 = vmatpush2.msra.mxu0 0.0
    %1574 = vmatprep.subr.mxu0 0.0
    %1575 = vmatpush2.msra.mxu0 0.0
    %1576 = vmatprep.subr.mxu0 0.0
    %1577 = vmatpush2.msra.mxu0 0.0
    %1578 = vmatprep.subr.mxu0 0.0
    %1579 = vmatpush2.msra.mxu0 0.0
    %1580 = vmatprep.subr.mxu0 0.0
    %1581 = vmatpush2.msra.mxu0 0.0
    %1582 = vmatprep.subr.mxu0 0.0
    %1583 = vmatpush2.msra.mxu0 0.0
    %1584 = vmatprep.subr.mxu0 0.0
    %1585 = vmatpush2.msra.mxu0 0.0
    %1586 = vmatprep.subr.mxu0 0.0
    %1587 = vmatpush2.msra.mxu0 0.0
    %1588 = vmatprep.subr.mxu0 0.0
    %1589 = vmatpush2.msra.mxu0 0.0
    %1590 = vmatprep.subr.mxu0 0.0
    %1591 = vmatpush2.msra.mxu0 0.0
    %1592 = vmatprep.subr.mxu0 0.0
    %1593 = vmatpush2.msra.mxu0 0.0
    %1594 = vmatprep.subr.mxu0 0.0
    %1595 = vmatpush2.msra.mxu0 0.0
    %1596 = vmatprep.mubr.f32.mxu0 0.0
    %v1597 = vand.u32 %v938, 4294901760
    %1598 = vmatmul.mubr.f32.gmra.mxu0 %v1597
    %v1599 = vpop.f32.mrf.mxu0
    %v1600 = vadd.f32 %v1513, %v1599
    %v1601 = vpop.f32.mrf.mxu0
    %1602 = vdwg.mxu0
    %v1603 = vmax.f32 %v1600, 0.0
    %vm1604 = vcmask 261120
    %1605 = vst.msk [vmem:[#allocation5] sm:$0xff] %vm1604, %v1603
    // Predicated region
    $region26: #{tpu_custom_call.1} parent=1 // pred_check
      _
    $region27: #{tpu_custom_call.1} parent=1 // pred_check_branch
      %1607 = sbr.rel (0) target = $region29
    $region28: #{tpu_custom_call.1} parent=1 // pred_region
      %s1609 = ssub.s32 128, 128
      %1610 = vsyncadd [#allocation4], %s1609
      %s1612 = sshll.u32 [#allocation5], 4
      %s1613 = int_to_ptr.vmem [resolvable:$true] %s1612
      %1615 = dma.vmem_to_hbm [thread:$0]  %s1613, 128, %s5, [#allocation4]
    $region29: #{tpu_custom_call.1} parent=1 // pred_fallthru
      _
    // Predicated region
    $region30: #{tpu_custom_call.1} parent=1 // pred_check
      _
    $region31: #{tpu_custom_call.1} parent=1 // pred_check_branch
      %1617 = sbr.rel (0) target = $region33
    $region32: #{tpu_custom_call.1} parent=1 // pred_region
      %1618 = dma.done [#allocation4], 128
    $region33: #{tpu_custom_call.1} parent=1 // pred_fallthru
      _
    %1619 = vsyncpa [#allocation3], 1
    %1620 = vsyncpa [#allocation4], 1

</llo_original>
